<compile_context>
chip_gen: v7x
topology: tpu7x:2x2x1
jax: 0.10.0
libtpu: 0.0.40
codegen_flags: <defaults>
</compile_context>

<pallas_src>
import math

import jax
import jax.numpy as jnp
from jax.experimental import pallas as pl
from jax.experimental.pallas import tpu as pltpu


HID1, HID2 = 400, 300            # logical hidden sizes of the torch module
HID1_PAD, HID2_PAD = 512, 384    # lane-aligned (multiple-of-128) padded sizes


def _round_up(x, m):
    return ((x + m - 1) // m) * m


# ---------------------------------------------------------------------------
# Kernel
# ---------------------------------------------------------------------------
def sac_policy_kernel(obs_ref, eps_ref,
                      w1_ref, b1_ref, w2_ref, b2_ref,
                      w3m_ref, b3m_ref, w3s_ref, b3s_ref,
                      out_ref):
    # ---- policy MLP: bf16 MXU matmuls with f32 accumulation, f32 tanh ----
    obs = obs_ref[...].astype(jnp.bfloat16)

    h1 = jnp.tanh(jnp.dot(obs, w1_ref[...],
                          preferred_element_type=jnp.float32) + b1_ref[...])
    h1 = h1.astype(jnp.bfloat16)

    h2 = jnp.tanh(jnp.dot(h1, w2_ref[...],
                          preferred_element_type=jnp.float32) + b2_ref[...])
    h2 = h2.astype(jnp.bfloat16)

    # Lane-aligned mean / log_std heads (both start at lane 0).
    mean_ = jnp.dot(h2, w3m_ref[...],
                    preferred_element_type=jnp.float32) + b3m_ref[...]
    log_std = jnp.dot(h2, w3s_ref[...],
                      preferred_element_type=jnp.float32) + b3s_ref[...]

    std = jnp.exp(log_std)

    # ---- dist.sample() with externally supplied standard-normal noise ----
    eps = eps_ref[...]
    action = mean_ + std * eps

    # ---- Normal(mean, std).log_prob(action) ----
    # with action = mean + std*eps this is -eps^2/2 - log(std) - 0.5*log(2*pi)
    half_log_2pi = jnp.float32(0.5 * math.log(2.0 * math.pi))
    logprob = -0.5 * eps * eps - log_std - half_log_2pi

    # Fused output: action in lanes [0, act), log_prob in lanes [act, 2*act).
    out_ref[...] = jnp.concatenate([action, logprob], axis=-1)


# ---------------------------------------------------------------------------
# Wrapper
# ---------------------------------------------------------------------------
def sac_policy_forward(obs, eps, params):
    """obs: (B, obs_size) f32, eps: (B, act_size) f32 standard-normal noise."""
    (w1, b1, w2, b2, w3m, b3m, w3s, b3s) = params
    B, obs_size = obs.shape
    act_size = eps.shape[1]

    # Batch tile: 256 rows matches the v6e/v7x MXU M dimension; for small
    # batches fall back to a single sublane-aligned (multiple of 8) tile.
    b_tile = 256
    if B < b_tile:
        b_tile = max(8, _round_up(B, 8))
    b_pad = _round_up(B, b_tile)
    if b_pad != B:
        obs = jnp.pad(obs, ((0, b_pad - B), (0, 0)))
        eps = jnp.pad(eps, ((0, b_pad - B), (0, 0)))

    grid = (b_pad // b_tile,)

    def tiled(shape):
        return pl.BlockSpec(shape, lambda i: (i, 0))

    def resident(shape):
        return pl.BlockSpec(shape, lambda i: (0, 0))

    weights = (w1, b1, w2, b2, w3m, b3m, w3s, b3s)

    out = pl.pallas_call(
        sac_policy_kernel,
        out_shape=jax.ShapeDtypeStruct((b_pad, 2 * act_size), jnp.float32),
        grid=grid,
        in_specs=[tiled((b_tile, obs_size)),
                  tiled((b_tile, act_size))]
                 + [resident(w.shape) for w in weights],
        out_specs=tiled((b_tile, 2 * act_size)),
        compiler_params=pltpu.CompilerParams(
            dimension_semantics=("parallel",)),
    )(obs, eps, *weights)

    action = out[:B, :act_size]
    logprob = out[:B, act_size:]
    # torch: log_prob(action).flatten()
    return action, logprob.reshape(-1)


# ---------------------------------------------------------------------------
# Deterministic parameter init (mimics torch.nn.Linear default
# U(-1/sqrt(fan_in), 1/sqrt(fan_in))), zero-padded to lane-aligned widths,
# weights stored in bf16, biases in f32, final layer split into two heads.
# ---------------------------------------------------------------------------
def init_policy_params(key, obs_size, act_size):
    def linear(k, fan_in, fan_out, pad_in, pad_out):
        kw, kb = jax.random.split(k)
        bound = 1.0 / math.sqrt(fan_in)
        w = jax.random.uniform(kw, (fan_in, fan_out), jnp.float32, -bound, bound)
        b = jax.random.uniform(kb, (1, fan_out), jnp.float32, -bound, bound)
        w = jnp.pad(w, ((0, pad_in - fan_in), (0, pad_out - fan_out)))
        b = jnp.pad(b, ((0, 0), (0, pad_out - fan_out)))
        return w.astype(jnp.bfloat16), b

    k1, k2, k3 = jax.random.split(key, 3)
    w1, b1 = linear(k1, obs_size, HID1, obs_size, HID1_PAD)
    w2, b2 = linear(k2, HID1, HID2, HID1_PAD, HID2_PAD)

    # Final layer (300 -> 2*act), split into mean / log_std heads.
    kw, kb = jax.random.split(k3)
    bound = 1.0 / math.sqrt(HID2)
    w3 = jax.random.uniform(kw, (HID2, 2 * act_size), jnp.float32, -bound, bound)
    b3 = jax.random.uniform(kb, (1, 2 * act_size), jnp.float32, -bound, bound)
    w3 = jnp.pad(w3, ((0, HID2_PAD - HID2), (0, 0)))
    w3m = w3[:, :act_size].astype(jnp.bfloat16)
    w3s = w3[:, act_size:].astype(jnp.bfloat16)
    b3m = b3[:, :act_size]
    b3s = b3[:, act_size:]
    return (w1, b1, w2, b2, w3m, b3m, w3s, b3s)


# ---------------------------------------------------------------------------
# Reference (plain JAX, same bf16/f32 numerics) for a quick sanity check
# ---------------------------------------------------------------------------
def reference_forward(obs, eps, params):
    (w1, b1, w2, b2, w3m, b3m, w3s, b3s) = params
    x = obs.astype(jnp.bfloat16)
    h1 = jnp.tanh(jnp.dot(x, w1, preferred_element_type=jnp.float32) + b1)
    h1 = h1.astype(jnp.bfloat16)
    h2 = jnp.tanh(jnp.dot(h1, w2, preferred_element_type=jnp.float32) + b2)
    h2 = h2.astype(jnp.bfloat16)
    mean_ = jnp.dot(h2, w3m, preferred_element_type=jnp.float32) + b3m
    log_std = jnp.dot(h2, w3s, preferred_element_type=jnp.float32) + b3s
    std = jnp.exp(log_std)
    action = mean_ + std * eps
    var = std * std
    logprob = -((action - mean_) ** 2) / (2 * var) - jnp.log(std) \
              - 0.5 * math.log(2 * math.pi)
    return action, logprob.reshape(-1)


if __name__ == "__main__":
    obs_size = 8     # convert_size(obs_space)  (1-D obs space)
    act_size = 4     # convert_size(act_space)  (1-D act space)
    batch = 2

    key = jax.random.PRNGKey(0)
    k_params, k_obs, k_eps = jax.random.split(key, 3)

    params = init_policy_params(k_params, obs_size, act_size)
    obs = jax.random.normal(k_obs, (batch, obs_size), jnp.float32)
    # TODO(synk): torch dist.sample() draws from torch's RNG stream; here the
    # standard-normal noise is generated with JAX and fed to the kernel.
    eps = jax.random.normal(k_eps, (batch, act_size), jnp.float32)

    action, log_prob = sac_policy_forward(obs, eps, params)
    jax.block_until_ready((action, log_prob))

    ref_action, ref_logprob = reference_forward(obs, eps, params)
    assert action.shape == (batch, act_size)
    assert log_prob.shape == (batch * act_size,)
    assert jnp.allclose(action, ref_action, atol=2e-3, rtol=2e-3)
    assert jnp.allclose(log_prob, ref_logprob, atol=2e-3, rtol=2e-3)

    print("KERNEL_OK")
</pallas_src>

<mosaic_0001>
module attributes {stable_mosaic.version = 11 : i64} {
  func.func @sac_policy_kernel(%arg0: i32, %arg1: memref<8x8xf32, #tpu.memory_space<vmem>>, %arg2: memref<8x4xf32, #tpu.memory_space<vmem>>, %arg3: memref<8x512xbf16, #tpu.memory_space<vmem>>, %arg4: memref<1x512xf32, #tpu.memory_space<vmem>>, %arg5: memref<512x384xbf16, #tpu.memory_space<vmem>>, %arg6: memref<1x384xf32, #tpu.memory_space<vmem>>, %arg7: memref<384x4xbf16, #tpu.memory_space<vmem>>, %arg8: memref<1x4xf32, #tpu.memory_space<vmem>>, %arg9: memref<384x4xbf16, #tpu.memory_space<vmem>>, %arg10: memref<1x4xf32, #tpu.memory_space<vmem>>, %arg11: memref<8x8xf32, #tpu.memory_space<vmem>>) attributes {dimension_semantics = [#tpu.dimension_semantics<parallel>], iteration_bounds = array<i64: 1>, scalar_prefetch = 0 : i64, scratch_operands = 0 : i64, tpu.core_type = #tpu.core_type<tc>, window_params = [{transform_indices = @transform_0, window_bounds = array<i64: 8, 8>}, {transform_indices = @transform_1, window_bounds = array<i64: 8, 4>}, {pipeline_mode = #tpu.pipeline_mode<synchronous>, transform_indices = @transform_2, window_bounds = array<i64: 8, 512>}, {pipeline_mode = #tpu.pipeline_mode<synchronous>, transform_indices = @transform_3, window_bounds = array<i64: 1, 512>}, {pipeline_mode = #tpu.pipeline_mode<synchronous>, transform_indices = @transform_4, window_bounds = array<i64: 512, 384>}, {pipeline_mode = #tpu.pipeline_mode<synchronous>, transform_indices = @transform_5, window_bounds = array<i64: 1, 384>}, {pipeline_mode = #tpu.pipeline_mode<synchronous>, transform_indices = @transform_6, window_bounds = array<i64: 384, 4>}, {pipeline_mode = #tpu.pipeline_mode<synchronous>, transform_indices = @transform_7, window_bounds = array<i64: 1, 4>}, {pipeline_mode = #tpu.pipeline_mode<synchronous>, transform_indices = @transform_8, window_bounds = array<i64: 384, 4>}, {pipeline_mode = #tpu.pipeline_mode<synchronous>, transform_indices = @transform_9, window_bounds = array<i64: 1, 4>}, {transform_indices = @transform_10, window_bounds = array<i64: 8, 8>}]} {
    %c0 = arith.constant 0 : index
    %c0_0 = arith.constant 0 : index
    %0 = vector.load %arg1[%c0, %c0_0] : memref<8x8xf32, #tpu.memory_space<vmem>>, vector<8x8xf32>
    %1 = arith.truncf %0 : vector<8x8xf32> to vector<8x8xbf16>
    %c0_1 = arith.constant 0 : index
    %c0_2 = arith.constant 0 : index
    %2 = vector.load %arg3[%c0_1, %c0_2] : memref<8x512xbf16, #tpu.memory_space<vmem>>, vector<8x512xbf16>
    %cst = arith.constant dense<0.000000e+00> : vector<8x512xf32>
    %3 = tpu.matmul %1, %2, %cst {dimension_numbers = #tpu.dot_dimension_numbers<[1], [0], [0], [1], [0, 0, 1, 1], [], []>} : vector<8x8xbf16>, vector<8x512xbf16>, vector<8x512xf32> -> vector<8x512xf32>
    %c0_3 = arith.constant 0 : index
    %c0_4 = arith.constant 0 : index
    %4 = vector.load %arg4[%c0_3, %c0_4] : memref<1x512xf32, #tpu.memory_space<vmem>>, vector<1x512xf32>
    %5 = vector.broadcast %4 : vector<1x512xf32> to vector<8x512xf32>
    %6 = arith.addf %3, %5 : vector<8x512xf32>
    %7 = math.tanh %6 : vector<8x512xf32>
    %8 = arith.truncf %7 : vector<8x512xf32> to vector<8x512xbf16>
    %c0_5 = arith.constant 0 : index
    %c0_6 = arith.constant 0 : index
    %9 = vector.load %arg5[%c0_5, %c0_6] : memref<512x384xbf16, #tpu.memory_space<vmem>>, vector<512x384xbf16>
    %cst_7 = arith.constant dense<0.000000e+00> : vector<8x384xf32>
    %10 = tpu.matmul %8, %9, %cst_7 {dimension_numbers = #tpu.dot_dimension_numbers<[1], [0], [0], [1], [0, 0, 1, 1], [], []>} : vector<8x512xbf16>, vector<512x384xbf16>, vector<8x384xf32> -> vector<8x384xf32>
    %c0_8 = arith.constant 0 : index
    %c0_9 = arith.constant 0 : index
    %11 = vector.load %arg6[%c0_8, %c0_9] : memref<1x384xf32, #tpu.memory_space<vmem>>, vector<1x384xf32>
    %12 = vector.broadcast %11 : vector<1x384xf32> to vector<8x384xf32>
    %13 = arith.addf %10, %12 : vector<8x384xf32>
    %14 = math.tanh %13 : vector<8x384xf32>
    %15 = arith.truncf %14 : vector<8x384xf32> to vector<8x384xbf16>
    %c0_10 = arith.constant 0 : index
    %c0_11 = arith.constant 0 : index
    %16 = vector.load %arg7[%c0_10, %c0_11] : memref<384x4xbf16, #tpu.memory_space<vmem>>, vector<384x4xbf16>
    %cst_12 = arith.constant dense<0.000000e+00> : vector<8x4xf32>
    %17 = tpu.matmul %15, %16, %cst_12 {dimension_numbers = #tpu.dot_dimension_numbers<[1], [0], [0], [1], [0, 0, 1, 1], [], []>} : vector<8x384xbf16>, vector<384x4xbf16>, vector<8x4xf32> -> vector<8x4xf32>
    %c0_13 = arith.constant 0 : index
    %c0_14 = arith.constant 0 : index
    %18 = vector.load %arg8[%c0_13, %c0_14] : memref<1x4xf32, #tpu.memory_space<vmem>>, vector<1x4xf32>
    %19 = vector.broadcast %18 : vector<1x4xf32> to vector<8x4xf32>
    %20 = arith.addf %17, %19 : vector<8x4xf32>
    %c0_15 = arith.constant 0 : index
    %c0_16 = arith.constant 0 : index
    %21 = vector.load %arg9[%c0_15, %c0_16] : memref<384x4xbf16, #tpu.memory_space<vmem>>, vector<384x4xbf16>
    %cst_17 = arith.constant dense<0.000000e+00> : vector<8x4xf32>
    %22 = tpu.matmul %15, %21, %cst_17 {dimension_numbers = #tpu.dot_dimension_numbers<[1], [0], [0], [1], [0, 0, 1, 1], [], []>} : vector<8x384xbf16>, vector<384x4xbf16>, vector<8x4xf32> -> vector<8x4xf32>
    %c0_18 = arith.constant 0 : index
    %c0_19 = arith.constant 0 : index
    %23 = vector.load %arg10[%c0_18, %c0_19] : memref<1x4xf32, #tpu.memory_space<vmem>>, vector<1x4xf32>
    %24 = vector.broadcast %23 : vector<1x4xf32> to vector<8x4xf32>
    %25 = arith.addf %22, %24 : vector<8x4xf32>
    %26 = math.exp %25 : vector<8x4xf32>
    %c0_20 = arith.constant 0 : index
    %c0_21 = arith.constant 0 : index
    %27 = vector.load %arg2[%c0_20, %c0_21] : memref<8x4xf32, #tpu.memory_space<vmem>>, vector<8x4xf32>
    %28 = arith.mulf %26, %27 : vector<8x4xf32>
    %29 = arith.addf %20, %28 : vector<8x4xf32>
    %cst_22 = arith.constant -5.000000e-01 : f32
    %30 = vector.broadcast %cst_22 : f32 to vector<8x4xf32>
    %31 = arith.mulf %30, %27 : vector<8x4xf32>
    %32 = arith.mulf %31, %27 : vector<8x4xf32>
    %33 = arith.subf %32, %25 : vector<8x4xf32>
    %cst_23 = arith.constant 0.918938517 : f32
    %34 = vector.broadcast %cst_23 : f32 to vector<8x4xf32>
    %35 = arith.subf %33, %34 : vector<8x4xf32>
    %36 = tpu.concatenate %29, %35 in 1 : vector<8x4xf32>, vector<8x4xf32> -> vector<8x8xf32>
    %c0_24 = arith.constant 0 : index
    %c0_25 = arith.constant 0 : index
    %37 = vector.load %arg11[%c0_24, %c0_25] : memref<8x8xf32, #tpu.memory_space<vmem>>, vector<8x8xf32>
    tpu.vector_store %arg11[%c0_24, %c0_25], %36 {strides = array<i32>} : memref<8x8xf32, #tpu.memory_space<vmem>>, vector<8x8xf32>,
    return
  }
  func.func @transform_0(%arg0: i32) -> (i32, i32) {
    %c0_i32 = arith.constant 0 : i32
    %c0_i32_0 = arith.constant 0 : i32
    return %arg0, %c0_i32 : i32, i32
  }
  func.func @transform_1(%arg0: i32) -> (i32, i32) {
    %c0_i32 = arith.constant 0 : i32
    %c0_i32_0 = arith.constant 0 : i32
    return %arg0, %c0_i32 : i32, i32
  }
  func.func @transform_2(%arg0: i32) -> (i32, i32) {
    %c0_i32 = arith.constant 0 : i32
    %c0_i32_0 = arith.constant 0 : i32
    %c0_i32_1 = arith.constant 0 : i32
    return %c0_i32, %c0_i32_0 : i32, i32
  }
  func.func @transform_3(%arg0: i32) -> (i32, i32) {
    %c0_i32 = arith.constant 0 : i32
    %c0_i32_0 = arith.constant 0 : i32
    %c0_i32_1 = arith.constant 0 : i32
    return %c0_i32, %c0_i32_0 : i32, i32
  }
  func.func @transform_4(%arg0: i32) -> (i32, i32) {
    %c0_i32 = arith.constant 0 : i32
    %c0_i32_0 = arith.constant 0 : i32
    %c0_i32_1 = arith.constant 0 : i32
    return %c0_i32, %c0_i32_0 : i32, i32
  }
  func.func @transform_5(%arg0: i32) -> (i32, i32) {
    %c0_i32 = arith.constant 0 : i32
    %c0_i32_0 = arith.constant 0 : i32
    %c0_i32_1 = arith.constant 0 : i32
    return %c0_i32, %c0_i32_0 : i32, i32
  }
  func.func @transform_6(%arg0: i32) -> (i32, i32) {
    %c0_i32 = arith.constant 0 : i32
    %c0_i32_0 = arith.constant 0 : i32
    %c0_i32_1 = arith.constant 0 : i32
    return %c0_i32, %c0_i32_0 : i32, i32
  }
  func.func @transform_7(%arg0: i32) -> (i32, i32) {
    %c0_i32 = arith.constant 0 : i32
    %c0_i32_0 = arith.constant 0 : i32
    %c0_i32_1 = arith.constant 0 : i32
    return %c0_i32, %c0_i32_0 : i32, i32
  }
  func.func @transform_8(%arg0: i32) -> (i32, i32) {
    %c0_i32 = arith.constant 0 : i32
    %c0_i32_0 = arith.constant 0 : i32
    %c0_i32_1 = arith.constant 0 : i32
    return %c0_i32, %c0_i32_0 : i32, i32
  }
  func.func @transform_9(%arg0: i32) -> (i32, i32) {
    %c0_i32 = arith.constant 0 : i32
    %c0_i32_0 = arith.constant 0 : i32
    %c0_i32_1 = arith.constant 0 : i32
    return %c0_i32, %c0_i32_0 : i32, i32
  }
  func.func @transform_10(%arg0: i32) -> (i32, i32) {
    %c0_i32 = arith.constant 0 : i32
    %c0_i32_0 = arith.constant 0 : i32
    return %arg0, %c0_i32 : i32, i32
  }
}

</mosaic_0001>

<llo_original>
// kernel: tpu_custom_call.1
$region0: #{tpu_custom_call.1}
  #allocation0 [shape = 'u32[]', space=smem, size = 0x4, offset = 0x4, fixed_abs, tag = 'smem constant byte address 0x4 - core index']
  #allocation1 [shape = 'u32[144,128]{1,0:T(1,128)}', space=vmem, size = 0x12000, scoped, tag = 'internal scratch']
  %s0 = inlined_call_operand.vmem [shape: f32[8,8], index: 0, kind: input, shape index: {}]
  %s1 = inlined_call_operand.vmem [shape: f32[8,4], index: 1, kind: input, shape index: {}]
  %s2 = inlined_call_operand.vmem [shape: bf16[8,512], index: 2, kind: input, shape index: {}]
  %s3 = inlined_call_operand.vmem [shape: f32[1,512], index: 3, kind: input, shape index: {}]
  %s4 = inlined_call_operand.hbm [shape: bf16[512,384], index: 4, kind: input, shape index: {}]
  %s5 = inlined_call_operand.vmem [shape: f32[1,384], index: 5, kind: input, shape index: {}]
  %s6 = inlined_call_operand.vmem [shape: bf16[384,4], index: 6, kind: input, shape index: {}]
  %s7 = inlined_call_operand.vmem [shape: f32[1,4], index: 7, kind: input, shape index: {}]
  %s8 = inlined_call_operand.vmem [shape: bf16[384,4], index: 8, kind: input, shape index: {}]
  %s9 = inlined_call_operand.vmem [shape: f32[1,4], index: 9, kind: input, shape index: {}]
  %s10 = inlined_call_operand.hbm [shape: f32[8,8], index: 10, kind: output, shape index: {}]
  %s11 = sld [smem:[#allocation0]]
  $region54: #{tpu_custom_call.1} parent=0
    _
  %s13 = ssub.s32 1, %s11
  %s14 = scalar_select 0, %s13, %s11
  $region1: #{tpu_custom_call.1} parent=0
    #allocation2 [shape = 'u8[393216]{0}', space=vmem, size = 0x60000, scoped, tag = 'input window, operand 4, single buffered']
    #allocation3 [shape = 's32[1]{0}', space=sflag, size = 0x4, scoped, tag = 'scoped memory for tpu_custom_call.1']
    #allocation4 [shape = 's32[1]{0}', space=sflag, size = 0x4, scoped, tag = 'scoped memory for tpu_custom_call.1']
    #allocation5 [shape = 'u8[4096]{0}', space=vmem, size = 0x1000, scoped, tag = 'output window, operand 0, single buffered']
    %15 = vsyncpa [#allocation3], 0
    %16 = vsyncpa [#allocation4], 0
    // Predicated region
    $region2: #{tpu_custom_call.1} parent=1 // pred_check
      _
    $region3: #{tpu_custom_call.1} parent=1 // pred_check_branch
      %18 = sbr.rel (0) target = $region5
    $region4: #{tpu_custom_call.1} parent=1 // pred_region
      _
    $region5: #{tpu_custom_call.1} parent=1 // pred_fallthru
      _
    // Predicated region
    $region6: #{tpu_custom_call.1} parent=1 // pred_check
      _
    $region7: #{tpu_custom_call.1} parent=1 // pred_check_branch
      %20 = sbr.rel (0) target = $region9
    $region8: #{tpu_custom_call.1} parent=1 // pred_region
      _
    $region9: #{tpu_custom_call.1} parent=1 // pred_fallthru
      _
    // Predicated region
    $region10: #{tpu_custom_call.1} parent=1 // pred_check
      _
    $region11: #{tpu_custom_call.1} parent=1 // pred_check_branch
      %22 = sbr.rel (0) target = $region13
    $region12: #{tpu_custom_call.1} parent=1 // pred_region
      _
    $region13: #{tpu_custom_call.1} parent=1 // pred_fallthru
      _
    // Predicated region
    $region14: #{tpu_custom_call.1} parent=1 // pred_check
      _
    $region15: #{tpu_custom_call.1} parent=1 // pred_check_branch
      %24 = sbr.rel (0) target = $region17
    $region16: #{tpu_custom_call.1} parent=1 // pred_region
      _
    $region17: #{tpu_custom_call.1} parent=1 // pred_fallthru
      _
    // Predicated region
    $region18: #{tpu_custom_call.1} parent=1 // pred_check
      _
    $region19: #{tpu_custom_call.1} parent=1 // pred_check_branch
      %26 = sbr.rel (0) target = $region21
    $region20: #{tpu_custom_call.1} parent=1 // pred_region
      %s28 = ssub.s32 12288, 12288
      %29 = vsyncadd [#allocation3], %s28
      %s30 = sshll.u32 [#allocation2], 4
      %s31 = int_to_ptr.vmem [resolvable:$true] %s30
      %36 = dma.hbm_to_vmem [thread:$0]  %s4, 12288, %s31, [#allocation3], 192, 192, 12
    $region21: #{tpu_custom_call.1} parent=1 // pred_fallthru
      _
    // Predicated region
    $region22: #{tpu_custom_call.1} parent=1 // pred_check
      _
    $region23: #{tpu_custom_call.1} parent=1 // pred_check_branch
      %38 = sbr.rel (0) target = $region25
    $region24: #{tpu_custom_call.1} parent=1 // pred_region
      _
    $region25: #{tpu_custom_call.1} parent=1 // pred_fallthru
      _
    // Predicated region
    $region26: #{tpu_custom_call.1} parent=1 // pred_check
      _
    $region27: #{tpu_custom_call.1} parent=1 // pred_check_branch
      %40 = sbr.rel (0) target = $region29
    $region28: #{tpu_custom_call.1} parent=1 // pred_region
      _
    $region29: #{tpu_custom_call.1} parent=1 // pred_fallthru
      _
    // Predicated region
    $region30: #{tpu_custom_call.1} parent=1 // pred_check
      _
    $region31: #{tpu_custom_call.1} parent=1 // pred_check_branch
      %42 = sbr.rel (0) target = $region33
    $region32: #{tpu_custom_call.1} parent=1 // pred_region
      _
    $region33: #{tpu_custom_call.1} parent=1 // pred_fallthru
      _
    // Predicated region
    $region34: #{tpu_custom_call.1} parent=1 // pred_check
      _
    $region35: #{tpu_custom_call.1} parent=1 // pred_check_branch
      %44 = sbr.rel (0) target = $region37
    $region36: #{tpu_custom_call.1} parent=1 // pred_region
      _
    $region37: #{tpu_custom_call.1} parent=1 // pred_fallthru
      _
    // Predicated region
    $region38: #{tpu_custom_call.1} parent=1 // pred_check
      _
    $region39: #{tpu_custom_call.1} parent=1 // pred_check_branch
      %46 = sbr.rel (0) target = $region41
    $region40: #{tpu_custom_call.1} parent=1 // pred_region
      _
    $region41: #{tpu_custom_call.1} parent=1 // pred_fallthru
      _
    // Predicated region
    $region42: #{tpu_custom_call.1} parent=1 // pred_check
      _
    $region43: #{tpu_custom_call.1} parent=1 // pred_check_branch
      %48 = sbr.rel (0) target = $region45
    $region44: #{tpu_custom_call.1} parent=1 // pred_region
      %49 = dma.done [#allocation3], 12288
    $region45: #{tpu_custom_call.1} parent=1 // pred_fallthru
      _
    %v51 = vld [vmem:[%s0] sm:$0xff]
    %v52 = vpack.c.bf16 %v51, %v51
    %v53 = vld [vmem:[%s2] sm:$0xff]
    %v54 = vld [vmem:[%s2 + $0x8] sm:$0xff]
    %v55 = vld [vmem:[%s3] sm:$0xf]
    %v57 = vlaneseq
    %v58 = vshrl.u32 %v57, 7
    %v59 = vsub.s32 0, %v58
    %v60 = vrot.slane %v55, %v59
    %v61 = vlaneseq
    %v62 = vshrl.u32 %v61, 7
    %v63 = vsub.s32 1, %v62
    %v64 = vrot.slane %v55, %v63
    %v65 = vlaneseq
    %v66 = vshrl.u32 %v65, 7
    %v67 = vsub.s32 2, %v66
    %v68 = vrot.slane %v55, %v67
    %v69 = vlaneseq
    %v70 = vshrl.u32 %v69, 7
    %v71 = vsub.s32 3, %v70
    %v72 = vrot.slane %v55, %v71
    %v79 = vunpack.c.l.b16 %v53
    %v80 = vunpack.c.h.b16 %v53
    %v81 = vunpack.c.l.b16 %v54
    %v82 = vunpack.c.h.b16 %v54
    %v83 = vpack.c.b16 %v79, %v79
    %v84 = vpack.c.b16 %v80, %v80
    %v85 = vpack.c.b16 %v81, %v81
    %v86 = vpack.c.b16 %v82, %v82
    %vm87 = vcmask 64512
    %v89 = vsel %vm87, %v52, 0
    %vm91 = vcmask 1043456
    %v93 = vsel %vm91, %v83, 0
    %v96 = vsel %vm91, %v84, 0
    %v99 = vsel %vm91, %v85, 0
    %v102 = vsel %vm91, %v86, 0
    %104 = vmatprep.subr.bf16.mxu0 %v96
    %105 = vmatpush1.bf16.msra.mxu0 %v93
    %106 = vmatprep.subr.bf16.mxu0 0
    %107 = vmatpush1.bf16.msra.mxu0 0
    %108 = vmatprep.subr.bf16.mxu0 0
    %109 = vmatpush1.bf16.msra.mxu0 0
    %110 = vmatprep.subr.bf16.mxu0 0
    %111 = vmatpush1.bf16.msra.mxu0 0
    %112 = vmatprep.subr.bf16.mxu0 0
    %113 = vmatpush1.bf16.msra.mxu0 0
    %114 = vmatprep.subr.bf16.mxu0 0
    %115 = vmatpush1.bf16.msra.mxu0 0
    %116 = vmatprep.subr.bf16.mxu0 0
    %117 = vmatpush1.bf16.msra.mxu0 0
    %118 = vmatprep.subr.bf16.mxu0 0
    %119 = vmatpush1.bf16.msra.mxu0 0
    %120 = vmatprep.subr.bf16.mxu0 0
    %121 = vmatpush1.bf16.msra.mxu0 0
    %122 = vmatprep.subr.bf16.mxu0 0
    %123 = vmatpush1.bf16.msra.mxu0 0
    %124 = vmatprep.subr.bf16.mxu0 0
    %125 = vmatpush1.bf16.msra.mxu0 0
    %126 = vmatprep.subr.bf16.mxu0 0
    %127 = vmatpush1.bf16.msra.mxu0 0
    %128 = vmatprep.subr.bf16.mxu0 0
    %129 = vmatpush1.bf16.msra.mxu0 0
    %130 = vmatprep.subr.bf16.mxu0 0
    %131 = vmatpush1.bf16.msra.mxu0 0
    %132 = vmatprep.subr.bf16.mxu0 0
    %133 = vmatpush1.bf16.msra.mxu0 0
    %134 = vmatprep.subr.bf16.mxu0 0
    %135 = vmatpush1.bf16.msra.mxu0 0
    %136 = vmatprep.mubr.bf16.mxu0 0
    %137 = vmatmul.mubr.bf16.gmra.mrb[0].mxu0 %v89
    %v138 = vpop.f32.mrb[0].mxu0
    %v139 = vadd.f32 %v60, %v138
    %v140 = vpop.f32.mrb[0].mxu0
    %v141 = vadd.f32 %v64, %v140
    %v142 = vpop.f32.mrb[0].mxu0
    %v143 = vpop.f32.mrb[0].mxu0
    %144 = vdwg.mxu0
    %145 = vmatprep.subr.bf16.mxu0 %v102
    %146 = vmatpush1.bf16.msra.mxu0 %v99
    %147 = vmatprep.subr.bf16.mxu0 0
    %148 = vmatpush1.bf16.msra.mxu0 0
    %149 = vmatprep.subr.bf16.mxu0 0
    %150 = vmatpush1.bf16.msra.mxu0 0
    %151 = vmatprep.subr.bf16.mxu0 0
    %152 = vmatpush1.bf16.msra.mxu0 0
    %153 = vmatprep.subr.bf16.mxu0 0
    %154 = vmatpush1.bf16.msra.mxu0 0
    %155 = vmatprep.subr.bf16.mxu0 0
    %156 = vmatpush1.bf16.msra.mxu0 0
    %157 = vmatprep.subr.bf16.mxu0 0
    %158 = vmatpush1.bf16.msra.mxu0 0
    %159 = vmatprep.subr.bf16.mxu0 0
    %160 = vmatpush1.bf16.msra.mxu0 0
    %161 = vmatprep.subr.bf16.mxu0 0
    %162 = vmatpush1.bf16.msra.mxu0 0
    %163 = vmatprep.subr.bf16.mxu0 0
    %164 = vmatpush1.bf16.msra.mxu0 0
    %165 = vmatprep.subr.bf16.mxu0 0
    %166 = vmatpush1.bf16.msra.mxu0 0
    %167 = vmatprep.subr.bf16.mxu0 0
    %168 = vmatpush1.bf16.msra.mxu0 0
    %169 = vmatprep.subr.bf16.mxu0 0
    %170 = vmatpush1.bf16.msra.mxu0 0
    %171 = vmatprep.subr.bf16.mxu0 0
    %172 = vmatpush1.bf16.msra.mxu0 0
    %173 = vmatprep.subr.bf16.mxu0 0
    %174 = vmatpush1.bf16.msra.mxu0 0
    %175 = vmatprep.subr.bf16.mxu0 0
    %176 = vmatpush1.bf16.msra.mxu0 0
    %177 = vmatprep.mubr.bf16.mxu0 0
    %178 = vmatmul.mubr.bf16.gmra.mrb[0].mxu0 %v89
    %v179 = vpop.f32.mrb[0].mxu0
    %v180 = vadd.f32 %v68, %v179
    %v181 = vpop.f32.mrb[0].mxu0
    %v182 = vadd.f32 %v72, %v181
    %v183 = vpop.f32.mrb[0].mxu0
    %v184 = vpop.f32.mrb[0].mxu0
    %185 = vdwg.mxu0
    %v186 = vtanh.pop %v139
    %v187 = vtanh.pop %v141
    %v188 = vtanh.pop %v180
    %v189 = vtanh.pop %v182
    %v190 = vpack.c.bf16 %v186, %v186
    %v191 = vpack.c.bf16 %v187, %v187
    %v192 = vpack.c.bf16 %v188, %v188
    %v193 = vpack.c.bf16 %v189, %v189
    %v194 = vld [vmem:[#allocation2] sm:$0xff]
    %v195 = vld [vmem:[#allocation2 + $0x8] sm:$0xf]
    %v196 = vld [vmem:[#allocation2 + $0xc] sm:$0xff]
    %v197 = vld [vmem:[#allocation2 + $0x14] sm:$0xf]
    %v198 = vld [vmem:[#allocation2 + $0x18] sm:$0xff]
    %v199 = vld [vmem:[#allocation2 + $0x20] sm:$0xf]
    %v200 = vld [vmem:[#allocation2 + $0x24] sm:$0xff]
    %v201 = vld [vmem:[#allocation2 + $0x2c] sm:$0xf]
    %v202 = vld [vmem:[#allocation2 + $0x30] sm:$0xff]
    %v203 = vld [vmem:[#allocation2 + $0x38] sm:$0xf]
    %v204 = vld [vmem:[#allocation2 + $0x3c] sm:$0xff]
    %v205 = vld [vmem:[#allocation2 + $0x44] sm:$0xf]
    %v206 = vld [vmem:[#allocation2 + $0x48] sm:$0xff]
    %v207 = vld [vmem:[#allocation2 + $0x50] sm:$0xf]
    %v208 = vld [vmem:[#allocation2 + $0x54] sm:$0xff]
    %v209 = vld [vmem:[#allocation2 + $0x5c] sm:$0xf]
    %v210 = vld [vmem:[#allocation2 + $0x60] sm:$0xff]
    %v211 = vld [vmem:[#allocation2 + $0x68] sm:$0xf]
    %v212 = vld [vmem:[#allocation2 + $0x6c] sm:$0xff]
    %v213 = vld [vmem:[#allocation2 + $0x74] sm:$0xf]
    %v214 = vld [vmem:[#allocation2 + $0x78] sm:$0xff]
    %v215 = vld [vmem:[#allocation2 + $0x80] sm:$0xf]
    %v216 = vld [vmem:[#allocation2 + $0x84] sm:$0xff]
    %v217 = vld [vmem:[#allocation2 + $0x8c] sm:$0xf]
    %v218 = vld [vmem:[#allocation2 + $0x90] sm:$0xff]
    %v219 = vld [vmem:[#allocation2 + $0x98] sm:$0xf]
    %v220 = vld [vmem:[#allocation2 + $0x9c] sm:$0xff]
    %v221 = vld [vmem:[#allocation2 + $0xa4] sm:$0xf]
    %v222 = vld [vmem:[#allocation2 + $0xa8] sm:$0xff]
    %v223 = vld [vmem:[#allocation2 + $0xb0] sm:$0xf]
    %v224 = vld [vmem:[#allocation2 + $0xb4] sm:$0xff]
    %v225 = vld [vmem:[#allocation2 + $0xbc] sm:$0xf]
    %v226 = vld [vmem:[#allocation2 + $0xc0] sm:$0xff]
    %v227 = vld [vmem:[#allocation2 + $0xc8] sm:$0xf]
    %v228 = vld [vmem:[#allocation2 + $0xcc] sm:$0xff]
    %v229 = vld [vmem:[#allocation2 + $0xd4] sm:$0xf]
    %v230 = vld [vmem:[#allocation2 + $0xd8] sm:$0xff]
    %v231 = vld [vmem:[#allocation2 + $0xe0] sm:$0xf]
    %v232 = vld [vmem:[#allocation2 + $0xe4] sm:$0xff]
    %v233 = vld [vmem:[#allocation2 + $0xec] sm:$0xf]
    %v234 = vld [vmem:[#allocation2 + $0xf0] sm:$0xff]
    %v235 = vld [vmem:[#allocation2 + $0xf8] sm:$0xf]
    %v236 = vld [vmem:[#allocation2 + $0xfc] sm:$0xff]
    %v237 = vld [vmem:[#allocation2 + $0x104] sm:$0xf]
    %v238 = vld [vmem:[#allocation2 + $0x108] sm:$0xff]
    %v239 = vld [vmem:[#allocation2 + $0x110] sm:$0xf]
    %v240 = vld [vmem:[#allocation2 + $0x114] sm:$0xff]
    %v241 = vld [vmem:[#allocation2 + $0x11c] sm:$0xf]
    %v242 = vld [vmem:[#allocation2 + $0x120] sm:$0xff]
    %v243 = vld [vmem:[#allocation2 + $0x128] sm:$0xf]
    %v244 = vld [vmem:[#allocation2 + $0x12c] sm:$0xff]
    %v245 = vld [vmem:[#allocation2 + $0x134] sm:$0xf]
    %v246 = vld [vmem:[#allocation2 + $0x138] sm:$0xff]
    %v247 = vld [vmem:[#allocation2 + $0x140] sm:$0xf]
    %v248 = vld [vmem:[#allocation2 + $0x144] sm:$0xff]
    %v249 = vld [vmem:[#allocation2 + $0x14c] sm:$0xf]
    %v250 = vld [vmem:[#allocation2 + $0x150] sm:$0xff]
    %v251 = vld [vmem:[#allocation2 + $0x158] sm:$0xf]
    %v252 = vld [vmem:[#allocation2 + $0x15c] sm:$0xff]
    %v253 = vld [vmem:[#allocation2 + $0x164] sm:$0xf]
    %v254 = vld [vmem:[#allocation2 + $0x168] sm:$0xff]
    %v255 = vld [vmem:[#allocation2 + $0x170] sm:$0xf]
    %v256 = vld [vmem:[#allocation2 + $0x174] sm:$0xff]
    %v257 = vld [vmem:[#allocation2 + $0x17c] sm:$0xf]
    %v258 = vld [vmem:[#allocation2 + $0x180] sm:$0xff]
    %v259 = vld [vmem:[#allocation2 + $0x188] sm:$0xf]
    %v260 = vld [vmem:[#allocation2 + $0x18c] sm:$0xff]
    %v261 = vld [vmem:[#allocation2 + $0x194] sm:$0xf]
    %v262 = vld [vmem:[#allocation2 + $0x198] sm:$0xff]
    %v263 = vld [vmem:[#allocation2 + $0x1a0] sm:$0xf]
    %v264 = vld [vmem:[#allocation2 + $0x1a4] sm:$0xff]
    %v265 = vld [vmem:[#allocation2 + $0x1ac] sm:$0xf]
    %v266 = vld [vmem:[#allocation2 + $0x1b0] sm:$0xff]
    %v267 = vld [vmem:[#allocation2 + $0x1b8] sm:$0xf]
    %v268 = vld [vmem:[#allocation2 + $0x1bc] sm:$0xff]
    %v269 = vld [vmem:[#allocation2 + $0x1c4] sm:$0xf]
    %v270 = vld [vmem:[#allocation2 + $0x1c8] sm:$0xff]
    %v271 = vld [vmem:[#allocation2 + $0x1d0] sm:$0xf]
    %v272 = vld [vmem:[#allocation2 + $0x1d4] sm:$0xff]
    %v273 = vld [vmem:[#allocation2 + $0x1dc] sm:$0xf]
    %v274 = vld [vmem:[#allocation2 + $0x1e0] sm:$0xff]
    %v275 = vld [vmem:[#allocation2 + $0x1e8] sm:$0xf]
    %v276 = vld [vmem:[#allocation2 + $0x1ec] sm:$0xff]
    %v277 = vld [vmem:[#allocation2 + $0x1f4] sm:$0xf]
    %v278 = vld [vmem:[#allocation2 + $0x1f8] sm:$0xff]
    %v279 = vld [vmem:[#allocation2 + $0x200] sm:$0xf]
    %v280 = vld [vmem:[#allocation2 + $0x204] sm:$0xff]
    %v281 = vld [vmem:[#allocation2 + $0x20c] sm:$0xf]
    %v282 = vld [vmem:[#allocation2 + $0x210] sm:$0xff]
    %v283 = vld [vmem:[#allocation2 + $0x218] sm:$0xf]
    %v284 = vld [vmem:[#allocation2 + $0x21c] sm:$0xff]
    %v285 = vld [vmem:[#allocation2 + $0x224] sm:$0xf]
    %v286 = vld [vmem:[#allocation2 + $0x228] sm:$0xff]
    %v287 = vld [vmem:[#allocation2 + $0x230] sm:$0xf]
    %v288 = vld [vmem:[#allocation2 + $0x234] sm:$0xff]
    %v289 = vld [vmem:[#allocation2 + $0x23c] sm:$0xf]
    %v290 = vld [vmem:[#allocation2 + $0x240] sm:$0xff]
    %v291 = vld [vmem:[#allocation2 + $0x248] sm:$0xf]
    %v292 = vld [vmem:[#allocation2 + $0x24c] sm:$0xff]
    %v293 = vld [vmem:[#allocation2 + $0x254] sm:$0xf]
    %v294 = vld [vmem:[#allocation2 + $0x258] sm:$0xff]
    %v295 = vld [vmem:[#allocation2 + $0x260] sm:$0xf]
    %v296 = vld [vmem:[#allocation2 + $0x264] sm:$0xff]
    %v297 = vld [vmem:[#allocation2 + $0x26c] sm:$0xf]
    %v298 = vld [vmem:[#allocation2 + $0x270] sm:$0xff]
    %v299 = vld [vmem:[#allocation2 + $0x278] sm:$0xf]
    %v300 = vld [vmem:[#allocation2 + $0x27c] sm:$0xff]
    %v301 = vld [vmem:[#allocation2 + $0x284] sm:$0xf]
    %v302 = vld [vmem:[#allocation2 + $0x288] sm:$0xff]
    %v303 = vld [vmem:[#allocation2 + $0x290] sm:$0xf]
    %v304 = vld [vmem:[#allocation2 + $0x294] sm:$0xff]
    %v305 = vld [vmem:[#allocation2 + $0x29c] sm:$0xf]
    %v306 = vld [vmem:[#allocation2 + $0x2a0] sm:$0xff]
    %v307 = vld [vmem:[#allocation2 + $0x2a8] sm:$0xf]
    %v308 = vld [vmem:[#allocation2 + $0x2ac] sm:$0xff]
    %v309 = vld [vmem:[#allocation2 + $0x2b4] sm:$0xf]
    %v310 = vld [vmem:[#allocation2 + $0x2b8] sm:$0xff]
    %v311 = vld [vmem:[#allocation2 + $0x2c0] sm:$0xf]
    %v312 = vld [vmem:[#allocation2 + $0x2c4] sm:$0xff]
    %v313 = vld [vmem:[#allocation2 + $0x2cc] sm:$0xf]
    %v314 = vld [vmem:[#allocation2 + $0x2d0] sm:$0xff]
    %v315 = vld [vmem:[#allocation2 + $0x2d8] sm:$0xf]
    %v316 = vld [vmem:[#allocation2 + $0x2dc] sm:$0xff]
    %v317 = vld [vmem:[#allocation2 + $0x2e4] sm:$0xf]
    %v318 = vld [vmem:[#allocation2 + $0x2e8] sm:$0xff]
    %v319 = vld [vmem:[#allocation2 + $0x2f0] sm:$0xf]
    %v320 = vld [vmem:[#allocation2 + $0x2f4] sm:$0xff]
    %v321 = vld [vmem:[#allocation2 + $0x2fc] sm:$0xf]
    %v322 = vld [vmem:[%s5] sm:$0x7]
    %v324 = vlaneseq
    %v325 = vshrl.u32 %v324, 7
    %v326 = vsub.s32 0, %v325
    %v327 = vrot.slane %v322, %v326
    %v328 = vlaneseq
    %v329 = vshrl.u32 %v328, 7
    %v330 = vsub.s32 1, %v329
    %v331 = vrot.slane %v322, %v330
    %v332 = vlaneseq
    %v333 = vshrl.u32 %v332, 7
    %v334 = vsub.s32 2, %v333
    %v335 = vrot.slane %v322, %v334
    %v467 = vunpack.c.l.b16 %v194
    %v468 = vunpack.c.h.b16 %v194
    %v469 = vunpack.c.l.b16 %v195
    %v470 = vunpack.c.l.b16 %v196
    %v471 = vunpack.c.h.b16 %v196
    %v472 = vunpack.c.l.b16 %v197
    %v473 = vunpack.c.l.b16 %v198
    %v474 = vunpack.c.h.b16 %v198
    %v475 = vunpack.c.l.b16 %v199
    %v476 = vunpack.c.l.b16 %v200
    %v477 = vunpack.c.h.b16 %v200
    %v478 = vunpack.c.l.b16 %v201
    %v479 = vunpack.c.l.b16 %v202
    %v480 = vunpack.c.h.b16 %v202
    %v481 = vunpack.c.l.b16 %v203
    %v482 = vunpack.c.l.b16 %v204
    %v483 = vunpack.c.h.b16 %v204
    %v484 = vunpack.c.l.b16 %v205
    %v485 = vunpack.c.l.b16 %v206
    %v486 = vunpack.c.h.b16 %v206
    %v487 = vunpack.c.l.b16 %v207
    %v488 = vunpack.c.l.b16 %v208
    %v489 = vunpack.c.h.b16 %v208
    %v490 = vunpack.c.l.b16 %v209
    %v491 = vunpack.c.l.b16 %v210
    %v492 = vunpack.c.h.b16 %v210
    %v493 = vunpack.c.l.b16 %v211
    %v494 = vunpack.c.l.b16 %v212
    %v495 = vunpack.c.h.b16 %v212
    %v496 = vunpack.c.l.b16 %v213
    %v497 = vunpack.c.l.b16 %v214
    %v498 = vunpack.c.h.b16 %v214
    %v499 = vunpack.c.l.b16 %v215
    %v500 = vunpack.c.l.b16 %v216
    %v501 = vunpack.c.h.b16 %v216
    %v502 = vunpack.c.l.b16 %v217
    %v503 = vunpack.c.l.b16 %v218
    %v504 = vunpack.c.h.b16 %v218
    %v505 = vunpack.c.l.b16 %v219
    %v506 = vunpack.c.l.b16 %v220
    %v507 = vunpack.c.h.b16 %v220
    %v508 = vunpack.c.l.b16 %v221
    %v509 = vunpack.c.l.b16 %v222
    %v510 = vunpack.c.h.b16 %v222
    %v511 = vunpack.c.l.b16 %v223
    %v512 = vunpack.c.l.b16 %v224
    %v513 = vunpack.c.h.b16 %v224
    %v514 = vunpack.c.l.b16 %v225
    %v515 = vunpack.c.l.b16 %v226
    %v516 = vunpack.c.h.b16 %v226
    %v517 = vunpack.c.l.b16 %v227
    %v518 = vunpack.c.l.b16 %v228
    %v519 = vunpack.c.h.b16 %v228
    %v520 = vunpack.c.l.b16 %v229
    %v521 = vunpack.c.l.b16 %v230
    %v522 = vunpack.c.h.b16 %v230
    %v523 = vunpack.c.l.b16 %v231
    %v524 = vunpack.c.l.b16 %v232
    %v525 = vunpack.c.h.b16 %v232
    %v526 = vunpack.c.l.b16 %v233
    %v527 = vunpack.c.l.b16 %v234
    %v528 = vunpack.c.h.b16 %v234
    %v529 = vunpack.c.l.b16 %v235
    %v530 = vunpack.c.l.b16 %v236
    %v531 = vunpack.c.h.b16 %v236
    %v532 = vunpack.c.l.b16 %v237
    %v533 = vunpack.c.l.b16 %v238
    %v534 = vunpack.c.h.b16 %v238
    %v535 = vunpack.c.l.b16 %v239
    %v536 = vunpack.c.l.b16 %v240
    %v537 = vunpack.c.h.b16 %v240
    %v538 = vunpack.c.l.b16 %v241
    %v539 = vunpack.c.l.b16 %v242
    %v540 = vunpack.c.h.b16 %v242
    %v541 = vunpack.c.l.b16 %v243
    %v542 = vunpack.c.l.b16 %v244
    %v543 = vunpack.c.h.b16 %v244
    %v544 = vunpack.c.l.b16 %v245
    %v545 = vunpack.c.l.b16 %v246
    %v546 = vunpack.c.h.b16 %v246
    %v547 = vunpack.c.l.b16 %v247
    %v548 = vunpack.c.l.b16 %v248
    %v549 = vunpack.c.h.b16 %v248
    %v550 = vunpack.c.l.b16 %v249
    %v551 = vunpack.c.l.b16 %v250
    %v552 = vunpack.c.h.b16 %v250
    %v553 = vunpack.c.l.b16 %v251
    %v554 = vunpack.c.l.b16 %v252
    %v555 = vunpack.c.h.b16 %v252
    %v556 = vunpack.c.l.b16 %v253
    %v557 = vunpack.c.l.b16 %v254
    %v558 = vunpack.c.h.b16 %v254
    %v559 = vunpack.c.l.b16 %v255
    %v560 = vunpack.c.l.b16 %v256
    %v561 = vunpack.c.h.b16 %v256
    %v562 = vunpack.c.l.b16 %v257
    %v563 = vunpack.c.l.b16 %v258
    %v564 = vunpack.c.h.b16 %v258
    %v565 = vunpack.c.l.b16 %v259
    %v566 = vunpack.c.l.b16 %v260
    %v567 = vunpack.c.h.b16 %v260
    %v568 = vunpack.c.l.b16 %v261
    %v569 = vunpack.c.l.b16 %v262
    %v570 = vunpack.c.h.b16 %v262
    %v571 = vunpack.c.l.b16 %v263
    %v572 = vunpack.c.l.b16 %v264
    %v573 = vunpack.c.h.b16 %v264
    %v574 = vunpack.c.l.b16 %v265
    %v575 = vunpack.c.l.b16 %v266
    %v576 = vunpack.c.h.b16 %v266
    %v577 = vunpack.c.l.b16 %v267
    %v578 = vunpack.c.l.b16 %v268
    %v579 = vunpack.c.h.b16 %v268
    %v580 = vunpack.c.l.b16 %v269
    %v581 = vunpack.c.l.b16 %v270
    %v582 = vunpack.c.h.b16 %v270
    %v583 = vunpack.c.l.b16 %v271
    %v584 = vunpack.c.l.b16 %v272
    %v585 = vunpack.c.h.b16 %v272
    %v586 = vunpack.c.l.b16 %v273
    %v587 = vunpack.c.l.b16 %v274
    %v588 = vunpack.c.h.b16 %v274
    %v589 = vunpack.c.l.b16 %v275
    %v590 = vunpack.c.l.b16 %v276
    %v591 = vunpack.c.h.b16 %v276
    %v592 = vunpack.c.l.b16 %v277
    %v593 = vunpack.c.l.b16 %v278
    %v594 = vunpack.c.h.b16 %v278
    %v595 = vunpack.c.l.b16 %v279
    %v596 = vunpack.c.l.b16 %v280
    %v597 = vunpack.c.h.b16 %v280
    %v598 = vunpack.c.l.b16 %v281
    %v599 = vunpack.c.l.b16 %v282
    %v600 = vunpack.c.h.b16 %v282
    %v601 = vunpack.c.l.b16 %v283
    %v602 = vunpack.c.l.b16 %v284
    %v603 = vunpack.c.h.b16 %v284
    %v604 = vunpack.c.l.b16 %v285
    %v605 = vunpack.c.l.b16 %v286
    %v606 = vunpack.c.h.b16 %v286
    %v607 = vunpack.c.l.b16 %v287
    %v608 = vunpack.c.l.b16 %v288
    %v609 = vunpack.c.h.b16 %v288
    %v610 = vunpack.c.l.b16 %v289
    %v611 = vunpack.c.l.b16 %v290
    %v612 = vunpack.c.h.b16 %v290
    %v613 = vunpack.c.l.b16 %v291
    %v614 = vunpack.c.l.b16 %v292
    %v615 = vunpack.c.h.b16 %v292
    %v616 = vunpack.c.l.b16 %v293
    %v617 = vunpack.c.l.b16 %v294
    %v618 = vunpack.c.h.b16 %v294
    %v619 = vunpack.c.l.b16 %v295
    %v620 = vunpack.c.l.b16 %v296
    %v621 = vunpack.c.h.b16 %v296
    %v622 = vunpack.c.l.b16 %v297
    %v623 = vunpack.c.l.b16 %v298
    %v624 = vunpack.c.h.b16 %v298
    %v625 = vunpack.c.l.b16 %v299
    %v626 = vunpack.c.l.b16 %v300
    %v627 = vunpack.c.h.b16 %v300
    %v628 = vunpack.c.l.b16 %v301
    %v629 = vunpack.c.l.b16 %v302
    %v630 = vunpack.c.h.b16 %v302
    %v631 = vunpack.c.l.b16 %v303
    %v632 = vunpack.c.l.b16 %v304
    %v633 = vunpack.c.h.b16 %v304
    %v634 = vunpack.c.l.b16 %v305
    %v635 = vunpack.c.l.b16 %v306
    %v636 = vunpack.c.h.b16 %v306
    %v637 = vunpack.c.l.b16 %v307
    %v638 = vunpack.c.l.b16 %v308
    %v639 = vunpack.c.h.b16 %v308
    %v640 = vunpack.c.l.b16 %v309
    %v641 = vunpack.c.l.b16 %v310
    %v642 = vunpack.c.h.b16 %v310
    %v643 = vunpack.c.l.b16 %v311
    %v644 = vunpack.c.l.b16 %v312
    %v645 = vunpack.c.h.b16 %v312
    %v646 = vunpack.c.l.b16 %v313
    %v647 = vunpack.c.l.b16 %v314
    %v648 = vunpack.c.h.b16 %v314
    %v649 = vunpack.c.l.b16 %v315
    %v650 = vunpack.c.l.b16 %v316
    %v651 = vunpack.c.h.b16 %v316
    %v652 = vunpack.c.l.b16 %v317
    %v653 = vunpack.c.l.b16 %v318
    %v654 = vunpack.c.h.b16 %v318
    %v655 = vunpack.c.l.b16 %v319
    %v656 = vunpack.c.l.b16 %v320
    %v657 = vunpack.c.h.b16 %v320
    %v658 = vunpack.c.l.b16 %v321
    %v659 = vpack.c.b16 %v470, %v467
    %v660 = vpack.c.b16 %v471, %v468
    %v661 = vpack.c.b16 %v472, %v469
    %v662 = vpack.c.b16 %v476, %v473
    %v663 = vpack.c.b16 %v477, %v474
    %v664 = vpack.c.b16 %v478, %v475
    %v665 = vpack.c.b16 %v482, %v479
    %v666 = vpack.c.b16 %v483, %v480
    %v667 = vpack.c.b16 %v484, %v481
    %v668 = vpack.c.b16 %v488, %v485
    %v669 = vpack.c.b16 %v489, %v486
    %v670 = vpack.c.b16 %v490, %v487
    %v671 = vpack.c.b16 %v494, %v491
    %v672 = vpack.c.b16 %v495, %v492
    %v673 = vpack.c.b16 %v496, %v493
    %v674 = vpack.c.b16 %v500, %v497
    %v675 = vpack.c.b16 %v501, %v498
    %v676 = vpack.c.b16 %v502, %v499
    %v677 = vpack.c.b16 %v506, %v503
    %v678 = vpack.c.b16 %v507, %v504
    %v679 = vpack.c.b16 %v508, %v505
    %v680 = vpack.c.b16 %v512, %v509
    %v681 = vpack.c.b16 %v513, %v510
    %v682 = vpack.c.b16 %v514, %v511
    %v683 = vpack.c.b16 %v518, %v515
    %v684 = vpack.c.b16 %v519, %v516
    %v685 = vpack.c.b16 %v520, %v517
    %v686 = vpack.c.b16 %v524, %v521
    %v687 = vpack.c.b16 %v525, %v522
    %v688 = vpack.c.b16 %v526, %v523
    %v689 = vpack.c.b16 %v530, %v527
    %v690 = vpack.c.b16 %v531, %v528
    %v691 = vpack.c.b16 %v532, %v529
    %v692 = vpack.c.b16 %v536, %v533
    %v693 = vpack.c.b16 %v537, %v534
    %v694 = vpack.c.b16 %v538, %v535
    %v695 = vpack.c.b16 %v542, %v539
    %v696 = vpack.c.b16 %v543, %v540
    %v697 = vpack.c.b16 %v544, %v541
    %v698 = vpack.c.b16 %v548, %v545
    %v699 = vpack.c.b16 %v549, %v546
    %v700 = vpack.c.b16 %v550, %v547
    %v701 = vpack.c.b16 %v554, %v551
    %v702 = vpack.c.b16 %v555, %v552
    %v703 = vpack.c.b16 %v556, %v553
    %v704 = vpack.c.b16 %v560, %v557
    %v705 = vpack.c.b16 %v561, %v558
    %v706 = vpack.c.b16 %v562, %v559
    %v707 = vpack.c.b16 %v566, %v563
    %v708 = vpack.c.b16 %v567, %v564
    %v709 = vpack.c.b16 %v568, %v565
    %v710 = vpack.c.b16 %v572, %v569
    %v711 = vpack.c.b16 %v573, %v570
    %v712 = vpack.c.b16 %v574, %v571
    %v713 = vpack.c.b16 %v578, %v575
    %v714 = vpack.c.b16 %v579, %v576
    %v715 = vpack.c.b16 %v580, %v577
    %v716 = vpack.c.b16 %v584, %v581
    %v717 = vpack.c.b16 %v585, %v582
    %v718 = vpack.c.b16 %v586, %v583
    %v719 = vpack.c.b16 %v590, %v587
    %v720 = vpack.c.b16 %v591, %v588
    %v721 = vpack.c.b16 %v592, %v589
    %v722 = vpack.c.b16 %v596, %v593
    %v723 = vpack.c.b16 %v597, %v594
    %v724 = vpack.c.b16 %v598, %v595
    %v725 = vpack.c.b16 %v602, %v599
    %v726 = vpack.c.b16 %v603, %v600
    %v727 = vpack.c.b16 %v604, %v601
    %v728 = vpack.c.b16 %v608, %v605
    %v729 = vpack.c.b16 %v609, %v606
    %v730 = vpack.c.b16 %v610, %v607
    %v731 = vpack.c.b16 %v614, %v611
    %v732 = vpack.c.b16 %v615, %v612
    %v733 = vpack.c.b16 %v616, %v613
    %v734 = vpack.c.b16 %v620, %v617
    %v735 = vpack.c.b16 %v621, %v618
    %v736 = vpack.c.b16 %v622, %v619
    %v737 = vpack.c.b16 %v626, %v623
    %v738 = vpack.c.b16 %v627, %v624
    %v739 = vpack.c.b16 %v628, %v625
    %v740 = vpack.c.b16 %v632, %v629
    %v741 = vpack.c.b16 %v633, %v630
    %v742 = vpack.c.b16 %v634, %v631
    %v743 = vpack.c.b16 %v638, %v635
    %v744 = vpack.c.b16 %v639, %v636
    %v745 = vpack.c.b16 %v640, %v637
    %v746 = vpack.c.b16 %v644, %v641
    %v747 = vpack.c.b16 %v645, %v642
    %v748 = vpack.c.b16 %v646, %v643
    %v749 = vpack.c.b16 %v650, %v647
    %v750 = vpack.c.b16 %v651, %v648
    %v751 = vpack.c.b16 %v652, %v649
    %v752 = vpack.c.b16 %v656, %v653
    %v753 = vpack.c.b16 %v657, %v654
    %v754 = vpack.c.b16 %v658, %v655
    %851 = vmatprep.subr.bf16.mxu0 %v660
    %852 = vmatpush1.bf16.msra.mxu0 %v659
    %853 = vmatprep.subr.bf16.mxu0 %v663
    %854 = vmatpush1.bf16.msra.mxu0 %v662
    %855 = vmatprep.subr.bf16.mxu0 %v666
    %856 = vmatpush1.bf16.msra.mxu0 %v665
    %857 = vmatprep.subr.bf16.mxu0 %v669
    %858 = vmatpush1.bf16.msra.mxu0 %v668
    %859 = vmatprep.subr.bf16.mxu0 %v672
    %860 = vmatpush1.bf16.msra.mxu0 %v671
    %861 = vmatprep.subr.bf16.mxu0 %v675
    %862 = vmatpush1.bf16.msra.mxu0 %v674
    %863 = vmatprep.subr.bf16.mxu0 %v678
    %864 = vmatpush1.bf16.msra.mxu0 %v677
    %865 = vmatprep.subr.bf16.mxu0 %v681
    %866 = vmatpush1.bf16.msra.mxu0 %v680
    %867 = vmatprep.subr.bf16.mxu0 %v684
    %868 = vmatpush1.bf16.msra.mxu0 %v683
    %869 = vmatprep.subr.bf16.mxu0 %v687
    %870 = vmatpush1.bf16.msra.mxu0 %v686
    %871 = vmatprep.subr.bf16.mxu0 %v690
    %872 = vmatpush1.bf16.msra.mxu0 %v689
    %873 = vmatprep.subr.bf16.mxu0 %v693
    %874 = vmatpush1.bf16.msra.mxu0 %v692
    %875 = vmatprep.subr.bf16.mxu0 %v696
    %876 = vmatpush1.bf16.msra.mxu0 %v695
    %877 = vmatprep.subr.bf16.mxu0 %v699
    %878 = vmatpush1.bf16.msra.mxu0 %v698
    %879 = vmatprep.subr.bf16.mxu0 %v702
    %880 = vmatpush1.bf16.msra.mxu0 %v701
    %881 = vmatprep.subr.bf16.mxu0 %v705
    %882 = vmatpush1.bf16.msra.mxu0 %v704
    %883 = vmatprep.mubr.bf16.mxu0 %v191
    %884 = vmatmul.mubr.bf16.gmra.mrb[0].mxu0 %v190
    %v885 = vpop.f32.mrb[0].mxu0
    %v886 = vadd.f32 %v327, %v885
    %v887 = vpop.f32.mrb[0].mxu0
    %v888 = vadd.f32 %v331, %v887
    %v889 = vpop.f32.mrb[0].mxu0
    %v890 = vpop.f32.mrb[0].mxu0
    %891 = vdwg.mxu0
    %892 = vmatprep.subr.bf16.mxu0 %v708
    %893 = vmatpush1.bf16.msra.mxu0 %v707
    %894 = vmatprep.subr.bf16.mxu0 %v711
    %895 = vmatpush1.bf16.msra.mxu0 %v710
    %896 = vmatprep.subr.bf16.mxu0 %v714
    %897 = vmatpush1.bf16.msra.mxu0 %v713
    %898 = vmatprep.subr.bf16.mxu0 %v717
    %899 = vmatpush1.bf16.msra.mxu0 %v716
    %900 = vmatprep.subr.bf16.mxu0 %v720
    %901 = vmatpush1.bf16.msra.mxu0 %v719
    %902 = vmatprep.subr.bf16.mxu0 %v723
    %903 = vmatpush1.bf16.msra.mxu0 %v722
    %904 = vmatprep.subr.bf16.mxu0 %v726
    %905 = vmatpush1.bf16.msra.mxu0 %v725
    %906 = vmatprep.subr.bf16.mxu0 %v729
    %907 = vmatpush1.bf16.msra.mxu0 %v728
    %908 = vmatprep.subr.bf16.mxu0 %v732
    %909 = vmatpush1.bf16.msra.mxu0 %v731
    %910 = vmatprep.subr.bf16.mxu0 %v735
    %911 = vmatpush1.bf16.msra.mxu0 %v734
    %912 = vmatprep.subr.bf16.mxu0 %v738
    %913 = vmatpush1.bf16.msra.mxu0 %v737
    %914 = vmatprep.subr.bf16.mxu0 %v741
    %915 = vmatpush1.bf16.msra.mxu0 %v740
    %916 = vmatprep.subr.bf16.mxu0 %v744
    %917 = vmatpush1.bf16.msra.mxu0 %v743
    %918 = vmatprep.subr.bf16.mxu0 %v747
    %919 = vmatpush1.bf16.msra.mxu0 %v746
    %920 = vmatprep.subr.bf16.mxu0 %v750
    %921 = vmatpush1.bf16.msra.mxu0 %v749
    %922 = vmatprep.subr.bf16.mxu0 %v753
    %923 = vmatpush1.bf16.msra.mxu0 %v752
    %924 = vmatprep.mubr.bf16.mxu0 %v193
    %925 = vmatmul.mubr.bf16.gmra.mrb[0].mxu0 %v192
    %v926 = vpop.f32.mrb[0].mxu0
    %v927 = vadd.f32 %v886, %v926
    %v928 = vpop.f32.mrb[0].mxu0
    %v929 = vadd.f32 %v888, %v928
    %v930 = vpop.f32.mrb[0].mxu0
    %v931 = vpop.f32.mrb[0].mxu0
    %932 = vdwg.mxu0
    %933 = vmatprep.subr.bf16.mxu0 0
    %934 = vmatpush1.bf16.msra.mxu0 %v661
    %935 = vmatprep.subr.bf16.mxu0 0
    %936 = vmatpush1.bf16.msra.mxu0 %v664
    %937 = vmatprep.subr.bf16.mxu0 0
    %938 = vmatpush1.bf16.msra.mxu0 %v667
    %939 = vmatprep.subr.bf16.mxu0 0
    %940 = vmatpush1.bf16.msra.mxu0 %v670
    %941 = vmatprep.subr.bf16.mxu0 0
    %942 = vmatpush1.bf16.msra.mxu0 %v673
    %943 = vmatprep.subr.bf16.mxu0 0
    %944 = vmatpush1.bf16.msra.mxu0 %v676
    %945 = vmatprep.subr.bf16.mxu0 0
    %946 = vmatpush1.bf16.msra.mxu0 %v679
    %947 = vmatprep.subr.bf16.mxu0 0
    %948 = vmatpush1.bf16.msra.mxu0 %v682
    %949 = vmatprep.subr.bf16.mxu0 0
    %950 = vmatpush1.bf16.msra.mxu0 %v685
    %951 = vmatprep.subr.bf16.mxu0 0
    %952 = vmatpush1.bf16.msra.mxu0 %v688
    %953 = vmatprep.subr.bf16.mxu0 0
    %954 = vmatpush1.bf16.msra.mxu0 %v691
    %955 = vmatprep.subr.bf16.mxu0 0
    %956 = vmatpush1.bf16.msra.mxu0 %v694
    %957 = vmatprep.subr.bf16.mxu0 0
    %958 = vmatpush1.bf16.msra.mxu0 %v697
    %959 = vmatprep.subr.bf16.mxu0 0
    %960 = vmatpush1.bf16.msra.mxu0 %v700
    %961 = vmatprep.subr.bf16.mxu0 0
    %962 = vmatpush1.bf16.msra.mxu0 %v703
    %963 = vmatprep.subr.bf16.mxu0 0
    %964 = vmatpush1.bf16.msra.mxu0 %v706
    %965 = vmatprep.mubr.bf16.mxu0 %v191
    %966 = vmatmul.mubr.bf16.gmra.mrb[0].mxu0 %v190
    %v967 = vpop.f32.mrb[0].mxu0
    %v968 = vadd.f32 %v335, %v967
    %v969 = vpop.f32.mrb[0].mxu0
    %v970 = vpop.f32.mrb[0].mxu0
    %v971 = vpop.f32.mrb[0].mxu0
    %972 = vdwg.mxu0
    %973 = vmatprep.subr.bf16.mxu0 0
    %974 = vmatpush1.bf16.msra.mxu0 %v709
    %975 = vmatprep.subr.bf16.mxu0 0
    %976 = vmatpush1.bf16.msra.mxu0 %v712
    %977 = vmatprep.subr.bf16.mxu0 0
    %978 = vmatpush1.bf16.msra.mxu0 %v715
    %979 = vmatprep.subr.bf16.mxu0 0
    %980 = vmatpush1.bf16.msra.mxu0 %v718
    %981 = vmatprep.subr.bf16.mxu0 0
    %982 = vmatpush1.bf16.msra.mxu0 %v721
    %983 = vmatprep.subr.bf16.mxu0 0
    %984 = vmatpush1.bf16.msra.mxu0 %v724
    %985 = vmatprep.subr.bf16.mxu0 0
    %986 = vmatpush1.bf16.msra.mxu0 %v727
    %987 = vmatprep.subr.bf16.mxu0 0
    %988 = vmatpush1.bf16.msra.mxu0 %v730
    %989 = vmatprep.subr.bf16.mxu0 0
    %990 = vmatpush1.bf16.msra.mxu0 %v733
    %991 = vmatprep.subr.bf16.mxu0 0
    %992 = vmatpush1.bf16.msra.mxu0 %v736
    %993 = vmatprep.subr.bf16.mxu0 0
    %994 = vmatpush1.bf16.msra.mxu0 %v739
    %995 = vmatprep.subr.bf16.mxu0 0
    %996 = vmatpush1.bf16.msra.mxu0 %v742
    %997 = vmatprep.subr.bf16.mxu0 0
    %998 = vmatpush1.bf16.msra.mxu0 %v745
    %999 = vmatprep.subr.bf16.mxu0 0
    %1000 = vmatpush1.bf16.msra.mxu0 %v748
    %1001 = vmatprep.subr.bf16.mxu0 0
    %1002 = vmatpush1.bf16.msra.mxu0 %v751
    %1003 = vmatprep.subr.bf16.mxu0 0
    %1004 = vmatpush1.bf16.msra.mxu0 %v754
    %1005 = vmatprep.mubr.bf16.mxu0 %v193
    %1006 = vmatmul.mubr.bf16.gmra.mrb[0].mxu0 %v192
    %v1007 = vpop.f32.mrb[0].mxu0
    %v1008 = vadd.f32 %v968, %v1007
    %v1009 = vpop.f32.mrb[0].mxu0
    %v1010 = vpop.f32.mrb[0].mxu0
    %v1011 = vpop.f32.mrb[0].mxu0
    %1012 = vdwg.mxu0
    %v1013 = vtanh.pop %v927
    %v1014 = vtanh.pop %v929
    %v1015 = vtanh.pop %v1008
    %v1016 = vpack.c.bf16 %v1013, %v1013
    %v1017 = vpack.c.bf16 %v1014, %v1014
    %v1018 = vpack.c.bf16 %v1015, %v1015
    %v1019 = vld [vmem:[%s6] sm:$0xf]
    %v1020 = vld [vmem:[%s6 + $0x4] sm:$0xf]
    %v1021 = vld [vmem:[%s6 + $0x8] sm:$0xf]
    %v1022 = vld [vmem:[%s6 + $0xc] sm:$0xf]
    %v1023 = vld [vmem:[%s6 + $0x10] sm:$0xf]
    %v1024 = vld [vmem:[%s6 + $0x14] sm:$0xf]
    %v1025 = vld [vmem:[%s6 + $0x18] sm:$0xf]
    %v1026 = vld [vmem:[%s6 + $0x1c] sm:$0xf]
    %v1027 = vld [vmem:[%s6 + $0x20] sm:$0xf]
    %v1028 = vld [vmem:[%s6 + $0x24] sm:$0xf]
    %v1029 = vld [vmem:[%s6 + $0x28] sm:$0xf]
    %v1030 = vld [vmem:[%s6 + $0x2c] sm:$0xf]
    %v1031 = vld [vmem:[%s6 + $0x30] sm:$0xf]
    %v1032 = vld [vmem:[%s6 + $0x34] sm:$0xf]
    %v1033 = vld [vmem:[%s6 + $0x38] sm:$0xf]
    %v1034 = vld [vmem:[%s6 + $0x3c] sm:$0xf]
    %v1035 = vld [vmem:[%s6 + $0x40] sm:$0xf]
    %v1036 = vld [vmem:[%s6 + $0x44] sm:$0xf]
    %v1037 = vld [vmem:[%s6 + $0x48] sm:$0xf]
    %v1038 = vld [vmem:[%s6 + $0x4c] sm:$0xf]
    %v1039 = vld [vmem:[%s6 + $0x50] sm:$0xf]
    %v1040 = vld [vmem:[%s6 + $0x54] sm:$0xf]
    %v1041 = vld [vmem:[%s6 + $0x58] sm:$0xf]
    %v1042 = vld [vmem:[%s6 + $0x5c] sm:$0xf]
    %v1043 = vld [vmem:[%s6 + $0x60] sm:$0xf]
    %v1044 = vld [vmem:[%s6 + $0x64] sm:$0xf]
    %v1045 = vld [vmem:[%s6 + $0x68] sm:$0xf]
    %v1046 = vld [vmem:[%s6 + $0x6c] sm:$0xf]
    %v1047 = vld [vmem:[%s6 + $0x70] sm:$0xf]
    %v1048 = vld [vmem:[%s6 + $0x74] sm:$0xf]
    %v1049 = vld [vmem:[%s6 + $0x78] sm:$0xf]
    %v1050 = vld [vmem:[%s6 + $0x7c] sm:$0xf]
    %v1051 = vld [vmem:[%s6 + $0x80] sm:$0xf]
    %v1052 = vld [vmem:[%s6 + $0x84] sm:$0xf]
    %v1053 = vld [vmem:[%s6 + $0x88] sm:$0xf]
    %v1054 = vld [vmem:[%s6 + $0x8c] sm:$0xf]
    %v1055 = vld [vmem:[%s6 + $0x90] sm:$0xf]
    %v1056 = vld [vmem:[%s6 + $0x94] sm:$0xf]
    %v1057 = vld [vmem:[%s6 + $0x98] sm:$0xf]
    %v1058 = vld [vmem:[%s6 + $0x9c] sm:$0xf]
    %v1059 = vld [vmem:[%s6 + $0xa0] sm:$0xf]
    %v1060 = vld [vmem:[%s6 + $0xa4] sm:$0xf]
    %v1061 = vld [vmem:[%s6 + $0xa8] sm:$0xf]
    %v1062 = vld [vmem:[%s6 + $0xac] sm:$0xf]
    %v1063 = vld [vmem:[%s6 + $0xb0] sm:$0xf]
    %v1064 = vld [vmem:[%s6 + $0xb4] sm:$0xf]
    %v1065 = vld [vmem:[%s6 + $0xb8] sm:$0xf]
    %v1066 = vld [vmem:[%s6 + $0xbc] sm:$0xf]
    %v1067 = vld [vmem:[%s7] sm:$0x1]
    %v1069 = vlaneseq
    %v1070 = vshrl.u32 %v1069, 7
    %v1071 = vsub.s32 0, %v1070
    %v1072 = vrot.slane %v1067, %v1071
    %v1122 = vunpack.c.l.b16 %v1019
    %v1123 = vunpack.c.l.b16 %v1020
    %v1124 = vunpack.c.l.b16 %v1021
    %v1125 = vunpack.c.l.b16 %v1022
    %v1126 = vunpack.c.l.b16 %v1023
    %v1127 = vunpack.c.l.b16 %v1024
    %v1128 = vunpack.c.l.b16 %v1025
    %v1129 = vunpack.c.l.b16 %v1026
    %v1130 = vunpack.c.l.b16 %v1027
    %v1131 = vunpack.c.l.b16 %v1028
    %v1132 = vunpack.c.l.b16 %v1029
    %v1133 = vunpack.c.l.b16 %v1030
    %v1134 = vunpack.c.l.b16 %v1031
    %v1135 = vunpack.c.l.b16 %v1032
    %v1136 = vunpack.c.l.b16 %v1033
    %v1137 = vunpack.c.l.b16 %v1034
    %v1138 = vunpack.c.l.b16 %v1035
    %v1139 = vunpack.c.l.b16 %v1036
    %v1140 = vunpack.c.l.b16 %v1037
    %v1141 = vunpack.c.l.b16 %v1038
    %v1142 = vunpack.c.l.b16 %v1039
    %v1143 = vunpack.c.l.b16 %v1040
    %v1144 = vunpack.c.l.b16 %v1041
    %v1145 = vunpack.c.l.b16 %v1042
    %v1146 = vunpack.c.l.b16 %v1043
    %v1147 = vunpack.c.l.b16 %v1044
    %v1148 = vunpack.c.l.b16 %v1045
    %v1149 = vunpack.c.l.b16 %v1046
    %v1150 = vunpack.c.l.b16 %v1047
    %v1151 = vunpack.c.l.b16 %v1048
    %v1152 = vunpack.c.l.b16 %v1049
    %v1153 = vunpack.c.l.b16 %v1050
    %v1154 = vunpack.c.l.b16 %v1051
    %v1155 = vunpack.c.l.b16 %v1052
    %v1156 = vunpack.c.l.b16 %v1053
    %v1157 = vunpack.c.l.b16 %v1054
    %v1158 = vunpack.c.l.b16 %v1055
    %v1159 = vunpack.c.l.b16 %v1056
    %v1160 = vunpack.c.l.b16 %v1057
    %v1161 = vunpack.c.l.b16 %v1058
    %v1162 = vunpack.c.l.b16 %v1059
    %v1163 = vunpack.c.l.b16 %v1060
    %v1164 = vunpack.c.l.b16 %v1061
    %v1165 = vunpack.c.l.b16 %v1062
    %v1166 = vunpack.c.l.b16 %v1063
    %v1167 = vunpack.c.l.b16 %v1064
    %v1168 = vunpack.c.l.b16 %v1065
    %v1169 = vunpack.c.l.b16 %v1066
    %v1170 = vpack.c.b16 %v1123, %v1122
    %v1171 = vpack.c.b16 %v1125, %v1124
    %v1172 = vpack.c.b16 %v1127, %v1126
    %v1173 = vpack.c.b16 %v1129, %v1128
    %v1174 = vpack.c.b16 %v1131, %v1130
    %v1175 = vpack.c.b16 %v1133, %v1132
    %v1176 = vpack.c.b16 %v1135, %v1134
    %v1177 = vpack.c.b16 %v1137, %v1136
    %v1178 = vpack.c.b16 %v1139, %v1138
    %v1179 = vpack.c.b16 %v1141, %v1140
    %v1180 = vpack.c.b16 %v1143, %v1142
    %v1181 = vpack.c.b16 %v1145, %v1144
    %v1182 = vpack.c.b16 %v1147, %v1146
    %v1183 = vpack.c.b16 %v1149, %v1148
    %v1184 = vpack.c.b16 %v1151, %v1150
    %v1185 = vpack.c.b16 %v1153, %v1152
    %v1186 = vpack.c.b16 %v1155, %v1154
    %v1187 = vpack.c.b16 %v1157, %v1156
    %v1188 = vpack.c.b16 %v1159, %v1158
    %v1189 = vpack.c.b16 %v1161, %v1160
    %v1190 = vpack.c.b16 %v1163, %v1162
    %v1191 = vpack.c.b16 %v1165, %v1164
    %v1192 = vpack.c.b16 %v1167, %v1166
    %v1193 = vpack.c.b16 %v1169, %v1168
    %1218 = vmatprep.subr.bf16.mxu0 0
    %1219 = vmatpush1.bf16.msra.mxu0 %v1170
    %1220 = vmatprep.subr.bf16.mxu0 0
    %1221 = vmatpush1.bf16.msra.mxu0 %v1171
    %1222 = vmatprep.subr.bf16.mxu0 0
    %1223 = vmatpush1.bf16.msra.mxu0 %v1172
    %1224 = vmatprep.subr.bf16.mxu0 0
    %1225 = vmatpush1.bf16.msra.mxu0 %v1173
    %1226 = vmatprep.subr.bf16.mxu0 0
    %1227 = vmatpush1.bf16.msra.mxu0 %v1174
    %1228 = vmatprep.subr.bf16.mxu0 0
    %1229 = vmatpush1.bf16.msra.mxu0 %v1175
    %1230 = vmatprep.subr.bf16.mxu0 0
    %1231 = vmatpush1.bf16.msra.mxu0 %v1176
    %1232 = vmatprep.subr.bf16.mxu0 0
    %1233 = vmatpush1.bf16.msra.mxu0 %v1177
    %1234 = vmatprep.subr.bf16.mxu0 0
    %1235 = vmatpush1.bf16.msra.mxu0 %v1178
    %1236 = vmatprep.subr.bf16.mxu0 0
    %1237 = vmatpush1.bf16.msra.mxu0 %v1179
    %1238 = vmatprep.subr.bf16.mxu0 0
    %1239 = vmatpush1.bf16.msra.mxu0 %v1180
    %1240 = vmatprep.subr.bf16.mxu0 0
    %1241 = vmatpush1.bf16.msra.mxu0 %v1181
    %1242 = vmatprep.subr.bf16.mxu0 0
    %1243 = vmatpush1.bf16.msra.mxu0 %v1182
    %1244 = vmatprep.subr.bf16.mxu0 0
    %1245 = vmatpush1.bf16.msra.mxu0 %v1183
    %1246 = vmatprep.subr.bf16.mxu0 0
    %1247 = vmatpush1.bf16.msra.mxu0 %v1184
    %1248 = vmatprep.subr.bf16.mxu0 0
    %1249 = vmatpush1.bf16.msra.mxu0 %v1185
    %1250 = vmatprep.mubr.bf16.mxu0 %v1017
    %1251 = vmatmul.mubr.bf16.gmra.mrb[0].mxu0 %v1016
    %v1252 = vpop.f32.mrb[0].mxu0
    %v1253 = vadd.f32 %v1072, %v1252
    %v1254 = vpop.f32.mrb[0].mxu0
    %v1255 = vpop.f32.mrb[0].mxu0
    %v1256 = vpop.f32.mrb[0].mxu0
    %1257 = vdwg.mxu0
    %1258 = vmatprep.subr.bf16.mxu0 0
    %1259 = vmatpush1.bf16.msra.mxu0 %v1186
    %1260 = vmatprep.subr.bf16.mxu0 0
    %1261 = vmatpush1.bf16.msra.mxu0 %v1187
    %1262 = vmatprep.subr.bf16.mxu0 0
    %1263 = vmatpush1.bf16.msra.mxu0 %v1188
    %1264 = vmatprep.subr.bf16.mxu0 0
    %1265 = vmatpush1.bf16.msra.mxu0 %v1189
    %1266 = vmatprep.subr.bf16.mxu0 0
    %1267 = vmatpush1.bf16.msra.mxu0 %v1190
    %1268 = vmatprep.subr.bf16.mxu0 0
    %1269 = vmatpush1.bf16.msra.mxu0 %v1191
    %1270 = vmatprep.subr.bf16.mxu0 0
    %1271 = vmatpush1.bf16.msra.mxu0 %v1192
    %1272 = vmatprep.subr.bf16.mxu0 0
    %1273 = vmatpush1.bf16.msra.mxu0 %v1193
    %1274 = vmatprep.subr.bf16.mxu0 0
    %1275 = vmatpush1.bf16.msra.mxu0 0
    %1276 = vmatprep.subr.bf16.mxu0 0
    %1277 = vmatpush1.bf16.msra.mxu0 0
    %1278 = vmatprep.subr.bf16.mxu0 0
    %1279 = vmatpush1.bf16.msra.mxu0 0
    %1280 = vmatprep.subr.bf16.mxu0 0
    %1281 = vmatpush1.bf16.msra.mxu0 0
    %1282 = vmatprep.subr.bf16.mxu0 0
    %1283 = vmatpush1.bf16.msra.mxu0 0
    %1284 = vmatprep.subr.bf16.mxu0 0
    %1285 = vmatpush1.bf16.msra.mxu0 0
    %1286 = vmatprep.subr.bf16.mxu0 0
    %1287 = vmatpush1.bf16.msra.mxu0 0
    %1288 = vmatprep.subr.bf16.mxu0 0
    %1289 = vmatpush1.bf16.msra.mxu0 0
    %1290 = vmatprep.mubr.bf16.mxu0 0
    %1291 = vmatmul.mubr.bf16.gmra.mrb[0].mxu0 %v1018
    %v1292 = vpop.f32.mrb[0].mxu0
    %v1293 = vadd.f32 %v1253, %v1292
    %v1294 = vpop.f32.mrb[0].mxu0
    %v1295 = vpop.f32.mrb[0].mxu0
    %v1296 = vpop.f32.mrb[0].mxu0
    %1297 = vdwg.mxu0
    %v1298 = vld [vmem:[%s8] sm:$0xf]
    %v1299 = vld [vmem:[%s8 + $0x4] sm:$0xf]
    %v1300 = vld [vmem:[%s8 + $0x8] sm:$0xf]
    %v1301 = vld [vmem:[%s8 + $0xc] sm:$0xf]
    %v1302 = vld [vmem:[%s8 + $0x10] sm:$0xf]
    %v1303 = vld [vmem:[%s8 + $0x14] sm:$0xf]
    %v1304 = vld [vmem:[%s8 + $0x18] sm:$0xf]
    %v1305 = vld [vmem:[%s8 + $0x1c] sm:$0xf]
    %v1306 = vld [vmem:[%s8 + $0x20] sm:$0xf]
    %v1307 = vld [vmem:[%s8 + $0x24] sm:$0xf]
    %v1308 = vld [vmem:[%s8 + $0x28] sm:$0xf]
    %v1309 = vld [vmem:[%s8 + $0x2c] sm:$0xf]
    %v1310 = vld [vmem:[%s8 + $0x30] sm:$0xf]
    %v1311 = vld [vmem:[%s8 + $0x34] sm:$0xf]
    %v1312 = vld [vmem:[%s8 + $0x38] sm:$0xf]
    %v1313 = vld [vmem:[%s8 + $0x3c] sm:$0xf]
    %v1314 = vld [vmem:[%s8 + $0x40] sm:$0xf]
    %v1315 = vld [vmem:[%s8 + $0x44] sm:$0xf]
    %v1316 = vld [vmem:[%s8 + $0x48] sm:$0xf]
    %v1317 = vld [vmem:[%s8 + $0x4c] sm:$0xf]
    %v1318 = vld [vmem:[%s8 + $0x50] sm:$0xf]
    %v1319 = vld [vmem:[%s8 + $0x54] sm:$0xf]
    %v1320 = vld [vmem:[%s8 + $0x58] sm:$0xf]
    %v1321 = vld [vmem:[%s8 + $0x5c] sm:$0xf]
    %v1322 = vld [vmem:[%s8 + $0x60] sm:$0xf]
    %v1323 = vld [vmem:[%s8 + $0x64] sm:$0xf]
    %v1324 = vld [vmem:[%s8 + $0x68] sm:$0xf]
    %v1325 = vld [vmem:[%s8 + $0x6c] sm:$0xf]
    %v1326 = vld [vmem:[%s8 + $0x70] sm:$0xf]
    %v1327 = vld [vmem:[%s8 + $0x74] sm:$0xf]
    %v1328 = vld [vmem:[%s8 + $0x78] sm:$0xf]
    %v1329 = vld [vmem:[%s8 + $0x7c] sm:$0xf]
    %v1330 = vld [vmem:[%s8 + $0x80] sm:$0xf]
    %v1331 = vld [vmem:[%s8 + $0x84] sm:$0xf]
    %v1332 = vld [vmem:[%s8 + $0x88] sm:$0xf]
    %v1333 = vld [vmem:[%s8 + $0x8c] sm:$0xf]
    %v1334 = vld [vmem:[%s8 + $0x90] sm:$0xf]
    %v1335 = vld [vmem:[%s8 + $0x94] sm:$0xf]
    %v1336 = vld [vmem:[%s8 + $0x98] sm:$0xf]
    %v1337 = vld [vmem:[%s8 + $0x9c] sm:$0xf]
    %v1338 = vld [vmem:[%s8 + $0xa0] sm:$0xf]
    %v1339 = vld [vmem:[%s8 + $0xa4] sm:$0xf]
    %v1340 = vld [vmem:[%s8 + $0xa8] sm:$0xf]
    %v1341 = vld [vmem:[%s8 + $0xac] sm:$0xf]
    %v1342 = vld [vmem:[%s8 + $0xb0] sm:$0xf]
    %v1343 = vld [vmem:[%s8 + $0xb4] sm:$0xf]
    %v1344 = vld [vmem:[%s8 + $0xb8] sm:$0xf]
    %v1345 = vld [vmem:[%s8 + $0xbc] sm:$0xf]
    %v1346 = vld [vmem:[%s9] sm:$0x1]
    %v1348 = vlaneseq
    %v1349 = vshrl.u32 %v1348, 7
    %v1350 = vsub.s32 0, %v1349
    %v1351 = vrot.slane %v1346, %v1350
    %v1401 = vunpack.c.l.b16 %v1298
    %v1402 = vunpack.c.l.b16 %v1299
    %v1403 = vunpack.c.l.b16 %v1300
    %v1404 = vunpack.c.l.b16 %v1301
    %v1405 = vunpack.c.l.b16 %v1302
    %v1406 = vunpack.c.l.b16 %v1303
    %v1407 = vunpack.c.l.b16 %v1304
    %v1408 = vunpack.c.l.b16 %v1305
    %v1409 = vunpack.c.l.b16 %v1306
    %v1410 = vunpack.c.l.b16 %v1307
    %v1411 = vunpack.c.l.b16 %v1308
    %v1412 = vunpack.c.l.b16 %v1309
    %v1413 = vunpack.c.l.b16 %v1310
    %v1414 = vunpack.c.l.b16 %v1311
    %v1415 = vunpack.c.l.b16 %v1312
    %v1416 = vunpack.c.l.b16 %v1313
    %v1417 = vunpack.c.l.b16 %v1314
    %v1418 = vunpack.c.l.b16 %v1315
    %v1419 = vunpack.c.l.b16 %v1316
    %v1420 = vunpack.c.l.b16 %v1317
    %v1421 = vunpack.c.l.b16 %v1318
    %v1422 = vunpack.c.l.b16 %v1319
    %v1423 = vunpack.c.l.b16 %v1320
    %v1424 = vunpack.c.l.b16 %v1321
    %v1425 = vunpack.c.l.b16 %v1322
    %v1426 = vunpack.c.l.b16 %v1323
    %v1427 = vunpack.c.l.b16 %v1324
    %v1428 = vunpack.c.l.b16 %v1325
    %v1429 = vunpack.c.l.b16 %v1326
    %v1430 = vunpack.c.l.b16 %v1327
    %v1431 = vunpack.c.l.b16 %v1328
    %v1432 = vunpack.c.l.b16 %v1329
    %v1433 = vunpack.c.l.b16 %v1330
    %v1434 = vunpack.c.l.b16 %v1331
    %v1435 = vunpack.c.l.b16 %v1332
    %v1436 = vunpack.c.l.b16 %v1333
    %v1437 = vunpack.c.l.b16 %v1334
    %v1438 = vunpack.c.l.b16 %v1335
    %v1439 = vunpack.c.l.b16 %v1336
    %v1440 = vunpack.c.l.b16 %v1337
    %v1441 = vunpack.c.l.b16 %v1338
    %v1442 = vunpack.c.l.b16 %v1339
    %v1443 = vunpack.c.l.b16 %v1340
    %v1444 = vunpack.c.l.b16 %v1341
    %v1445 = vunpack.c.l.b16 %v1342
    %v1446 = vunpack.c.l.b16 %v1343
    %v1447 = vunpack.c.l.b16 %v1344
    %v1448 = vunpack.c.l.b16 %v1345
    %v1449 = vpack.c.b16 %v1402, %v1401
    %v1450 = vpack.c.b16 %v1404, %v1403
    %v1451 = vpack.c.b16 %v1406, %v1405
    %v1452 = vpack.c.b16 %v1408, %v1407
    %v1453 = vpack.c.b16 %v1410, %v1409
    %v1454 = vpack.c.b16 %v1412, %v1411
    %v1455 = vpack.c.b16 %v1414, %v1413
    %v1456 = vpack.c.b16 %v1416, %v1415
    %v1457 = vpack.c.b16 %v1418, %v1417
    %v1458 = vpack.c.b16 %v1420, %v1419
    %v1459 = vpack.c.b16 %v1422, %v1421
    %v1460 = vpack.c.b16 %v1424, %v1423
    %v1461 = vpack.c.b16 %v1426, %v1425
    %v1462 = vpack.c.b16 %v1428, %v1427
    %v1463 = vpack.c.b16 %v1430, %v1429
    %v1464 = vpack.c.b16 %v1432, %v1431
    %v1465 = vpack.c.b16 %v1434, %v1433
    %v1466 = vpack.c.b16 %v1436, %v1435
    %v1467 = vpack.c.b16 %v1438, %v1437
    %v1468 = vpack.c.b16 %v1440, %v1439
    %v1469 = vpack.c.b16 %v1442, %v1441
    %v1470 = vpack.c.b16 %v1444, %v1443
    %v1471 = vpack.c.b16 %v1446, %v1445
    %v1472 = vpack.c.b16 %v1448, %v1447
    %1497 = vmatprep.subr.bf16.mxu0 0
    %1498 = vmatpush1.bf16.msra.mxu0 %v1449
    %1499 = vmatprep.subr.bf16.mxu0 0
    %1500 = vmatpush1.bf16.msra.mxu0 %v1450
    %1501 = vmatprep.subr.bf16.mxu0 0
    %1502 = vmatpush1.bf16.msra.mxu0 %v1451
    %1503 = vmatprep.subr.bf16.mxu0 0
    %1504 = vmatpush1.bf16.msra.mxu0 %v1452
    %1505 = vmatprep.subr.bf16.mxu0 0
    %1506 = vmatpush1.bf16.msra.mxu0 %v1453
    %1507 = vmatprep.subr.bf16.mxu0 0
    %1508 = vmatpush1.bf16.msra.mxu0 %v1454
    %1509 = vmatprep.subr.bf16.mxu0 0
    %1510 = vmatpush1.bf16.msra.mxu0 %v1455
    %1511 = vmatprep.subr.bf16.mxu0 0
    %1512 = vmatpush1.bf16.msra.mxu0 %v1456
    %1513 = vmatprep.subr.bf16.mxu0 0
    %1514 = vmatpush1.bf16.msra.mxu0 %v1457
    %1515 = vmatprep.subr.bf16.mxu0 0
    %1516 = vmatpush1.bf16.msra.mxu0 %v1458
    %1517 = vmatprep.subr.bf16.mxu0 0
    %1518 = vmatpush1.bf16.msra.mxu0 %v1459
    %1519 = vmatprep.subr.bf16.mxu0 0
    %1520 = vmatpush1.bf16.msra.mxu0 %v1460
    %1521 = vmatprep.subr.bf16.mxu0 0
    %1522 = vmatpush1.bf16.msra.mxu0 %v1461
    %1523 = vmatprep.subr.bf16.mxu0 0
    %1524 = vmatpush1.bf16.msra.mxu0 %v1462
    %1525 = vmatprep.subr.bf16.mxu0 0
    %1526 = vmatpush1.bf16.msra.mxu0 %v1463
    %1527 = vmatprep.subr.bf16.mxu0 0
    %1528 = vmatpush1.bf16.msra.mxu0 %v1464
    %1529 = vmatprep.mubr.bf16.mxu0 %v1017
    %1530 = vmatmul.mubr.bf16.gmra.mrb[0].mxu0 %v1016
    %v1531 = vpop.f32.mrb[0].mxu0
    %v1532 = vadd.f32 %v1351, %v1531
    %v1533 = vpop.f32.mrb[0].mxu0
    %v1534 = vpop.f32.mrb[0].mxu0
    %v1535 = vpop.f32.mrb[0].mxu0
    %1536 = vdwg.mxu0
    %1537 = vmatprep.subr.bf16.mxu0 0
    %1538 = vmatpush1.bf16.msra.mxu0 %v1465
    %1539 = vmatprep.subr.bf16.mxu0 0
    %1540 = vmatpush1.bf16.msra.mxu0 %v1466
    %1541 = vmatprep.subr.bf16.mxu0 0
    %1542 = vmatpush1.bf16.msra.mxu0 %v1467
    %1543 = vmatprep.subr.bf16.mxu0 0
    %1544 = vmatpush1.bf16.msra.mxu0 %v1468
    %1545 = vmatprep.subr.bf16.mxu0 0
    %1546 = vmatpush1.bf16.msra.mxu0 %v1469
    %1547 = vmatprep.subr.bf16.mxu0 0
    %1548 = vmatpush1.bf16.msra.mxu0 %v1470
    %1549 = vmatprep.subr.bf16.mxu0 0
    %1550 = vmatpush1.bf16.msra.mxu0 %v1471
    %1551 = vmatprep.subr.bf16.mxu0 0
    %1552 = vmatpush1.bf16.msra.mxu0 %v1472
    %1553 = vmatprep.subr.bf16.mxu0 0
    %1554 = vmatpush1.bf16.msra.mxu0 0
    %1555 = vmatprep.subr.bf16.mxu0 0
    %1556 = vmatpush1.bf16.msra.mxu0 0
    %1557 = vmatprep.subr.bf16.mxu0 0
    %1558 = vmatpush1.bf16.msra.mxu0 0
    %1559 = vmatprep.subr.bf16.mxu0 0
    %1560 = vmatpush1.bf16.msra.mxu0 0
    %1561 = vmatprep.subr.bf16.mxu0 0
    %1562 = vmatpush1.bf16.msra.mxu0 0
    %1563 = vmatprep.subr.bf16.mxu0 0
    %1564 = vmatpush1.bf16.msra.mxu0 0
    %1565 = vmatprep.subr.bf16.mxu0 0
    %1566 = vmatpush1.bf16.msra.mxu0 0
    %1567 = vmatprep.subr.bf16.mxu0 0
    %1568 = vmatpush1.bf16.msra.mxu0 0
    %1569 = vmatprep.mubr.bf16.mxu0 0
    %1570 = vmatmul.mubr.bf16.gmra.mrb[0].mxu0 %v1018
    %v1571 = vpop.f32.mrb[0].mxu0
    %v1572 = vadd.f32 %v1532, %v1571
    %v1573 = vpop.f32.mrb[0].mxu0
    %v1574 = vpop.f32.mrb[0].mxu0
    %v1575 = vpop.f32.mrb[0].mxu0
    %1576 = vdwg.mxu0
    %v1577 = vmul.f32 %v1572, 1.442695
    %v1578 = vpow.pop %v1577
    %v1579 = vld [vmem:[%s1] sm:$0xff]
    %v1580 = vmul.f32 %v1578, %v1579
    %v1581 = vadd.f32 %v1293, %v1580
    %v1582 = vmul.f32 %v1579, -0.5
    %v1583 = vmul.f32 %v1582, %v1579
    %v1584 = vsub.f32 %v1583, %v1572
    %v1585 = vsub.f32 %v1584, 0.9189385
    %1587 = vrot.lane.b32.xlu0 %v1585, 4
    %v1588 = vpop.permute.xlu0 %1587
    %vm1590 = vcmask 31744
    %v1591 = vsel %vm1590, %v1581, %v1588
    %1592 = vst.msk [vmem:[#allocation5] sm:$0xff] %vm87, %v1591
    // Predicated region
    $region46: #{tpu_custom_call.1} parent=1 // pred_check
      _
    $region47: #{tpu_custom_call.1} parent=1 // pred_check_branch
      %1594 = sbr.rel (0) target = $region49
    $region48: #{tpu_custom_call.1} parent=1 // pred_region
      %s1596 = ssub.s32 128, 128
      %1597 = vsyncadd [#allocation4], %s1596
      %s1599 = sshll.u32 [#allocation5], 4
      %s1600 = int_to_ptr.vmem [resolvable:$true] %s1599
      %1602 = dma.vmem_to_hbm [thread:$0]  %s1600, 128, %s10, [#allocation4]
    $region49: #{tpu_custom_call.1} parent=1 // pred_fallthru
      _
    // Predicated region
    $region50: #{tpu_custom_call.1} parent=1 // pred_check
      _
    $region51: #{tpu_custom_call.1} parent=1 // pred_check_branch
      %1604 = sbr.rel (0) target = $region53
    $region52: #{tpu_custom_call.1} parent=1 // pred_region
      %1605 = dma.done [#allocation4], 128
    $region53: #{tpu_custom_call.1} parent=1 // pred_fallthru
      _
    %1606 = vsyncpa [#allocation3], 1
    %1607 = vsyncpa [#allocation4], 1

</llo_original>
